<compile_context>
chip_gen: v5e
topology: v5e:2x2
jax: 0.10.0
libtpu: 0.0.40
codegen_flags: <defaults>
</compile_context>

<pallas_src>
import functools
import math

import numpy as np
import jax
import jax.numpy as jnp
from jax import lax
from jax.experimental import pallas as pl
from jax.experimental.pallas import tpu as pltpu


# ----------------------------------------------------------------------------
# Fused encoder kernel: all conv layers + both FC heads, one batch element per
# grid step.  Only dot / static slices / add / max / casts are used in-kernel.
# ----------------------------------------------------------------------------
def _encoder_kernel(*refs, layer_dims, down_size, latent2):
    nl = len(layer_dims)
    x_ref = refs[0]                 # (1, H, W*Cin)        bf16 input block
    wh_ref = refs[1 + 3 * nl]       # (feat, 2*latent)     bf16 fused FC weights
    bh_ref = refs[2 + 3 * nl]       # (1, 2*latent)        f32  fused FC bias
    out_ref = refs[3 + 3 * nl]      # (1, 1, 2*latent)     f32  output block

    a = x_ref[0]                    # (H, W*Cin) activation in row layout

    for l, (Ho, Wo, Cout) in enumerate(layer_dims):
        s_ref = refs[1 + 3 * l]     # (3*Ho, H)            bf16 0/1 row-select
        m_ref = refs[2 + 3 * l]     # (3, W*Cin, Wo*Cout)  bf16 lowered weights
        b_ref = refs[3 + 3 * l]     # (1, Wo*Cout)         f32  tiled bias

        # Vertical taps + stride + H zero-padding: one 0/1 matmul (exact
        # pass-through of bf16 activation rows).
        xs = jnp.dot(s_ref[...], a.astype(jnp.bfloat16),
                     preferred_element_type=jnp.float32)       # (3*Ho, W*Cin)

        # Horizontal taps + stride + W zero-padding folded into the lowered
        # (im2col-style) weights: 3 lane-dense MXU matmuls, f32 accumulation.
        acc = None
        for dh in range(3):
            part = jnp.dot(xs[dh * Ho:(dh + 1) * Ho, :].astype(jnp.bfloat16),
                           m_ref[dh],
                           preferred_element_type=jnp.float32)  # (Ho, Wo*Cout)
            acc = part if acc is None else acc + part

        # bias + ReLU epilogue in f32
        a = jnp.maximum(acc + b_ref[...], 0.0)

    # Fused fc_mean / fc_logvar.  The channel-major flatten of the PyTorch
    # `view(N, -1)` is folded into the row permutation of wh_ref, so we simply
    # contract the final activation row by row (down_size rows, always 4).
    wc = layer_dims[-1][1] * layer_dims[-1][2]                  # W_f * C_f
    heads = None
    for h in range(down_size):
        part = jnp.dot(a[h:h + 1, :].astype(jnp.bfloat16),
                       wh_ref[h * wc:(h + 1) * wc, :],
                       preferred_element_type=jnp.float32)      # (1, 2*latent)
        heads = part if heads is None else heads + part
    out_ref[0] = (heads + bh_ref[...]).astype(out_ref.dtype)


# ----------------------------------------------------------------------------
# Parameter prep: lower each conv layer to (row-select, banded-weight, bias)
# matrices; permute + fuse the FC head weights.  Done once, outside the kernel.
# ----------------------------------------------------------------------------
def _build_row_select(H, Ho, stride):
    S = np.zeros((3, Ho, H), np.float32)
    for dh in range(3):
        for i in range(Ho):
            h = stride * i + dh - 1          # padding = 1
            if 0 <= h < H:
                S[dh, i, h] = 1.0
    return S.reshape(3 * Ho, H)


def _build_lowered_weight(wt, W, Wo, stride):
    # wt: (Cout, Cin, 3, 3) -> (3, W*Cin, Wo*Cout) banded im2col weight.
    Cout, Cin = wt.shape[0], wt.shape[1]
    M = np.zeros((3, W, Cin, Wo, Cout), np.float32)
    for dh in range(3):
        for j in range(Wo):
            for dw in range(3):
                w = stride * j + dw - 1      # padding = 1
                if 0 <= w < W:
                    M[dh, w, :, j, :] = wt[:, :, dh, dw].T   # (Cin, Cout)
    return M.reshape(3, W * Cin, Wo * Cout)


def init_encoder_params(key, image_size, image_channels, latent_dim):
    """Mirrors the PyTorch module structure (OIHW conv weights, (out,in) FC)."""
    down_size = 4
    num_layer = int(math.log2(image_size) - math.log2(down_size))

    cfgs = [(image_channels, 16, 1)]                  # Conv2d(C, 16, 3, 1, 1)
    for i in range(num_layer):                        # Conv2d(c, 2c, 3, 2, 1)
        c = 2 ** min(4 + i, 9)
        cfgs.append((c, 2 * c, 2))

    params = {"conv": []}
    for (ci, co, s) in cfgs:
        key, kw, kb = jax.random.split(key, 3)
        bound = 1.0 / math.sqrt(9 * ci)               # PyTorch default-like init
        w = jax.random.uniform(kw, (co, ci, 3, 3), jnp.float32, -bound, bound)
        b = jax.random.uniform(kb, (co,), jnp.float32, -bound, bound)
        params["conv"].append({"w": w, "b": b, "stride": s})

    c_final = cfgs[-1][1]
    feat = down_size * down_size * c_final
    fb = 1.0 / math.sqrt(feat)
    key, k1, k2, k3, k4 = jax.random.split(key, 5)
    params["fc_mean"] = {
        "w": jax.random.uniform(k1, (latent_dim, feat), jnp.float32, -fb, fb),
        "b": jax.random.uniform(k2, (latent_dim,), jnp.float32, -fb, fb)}
    params["fc_logvar"] = {
        "w": jax.random.uniform(k3, (latent_dim, feat), jnp.float32, -fb, fb),
        "b": jax.random.uniform(k4, (latent_dim,), jnp.float32, -fb, fb)}
    params["meta"] = {"image_size": image_size, "image_channels": image_channels,
                      "latent_dim": latent_dim, "down_size": down_size}
    return params


def prepare_encoder(params):
    meta = params["meta"]
    H = W = meta["image_size"]
    L = meta["latent_dim"]
    down = meta["down_size"]

    prep = {"conv": [], "layer_dims": [], "meta": dict(meta)}
    for layer in params["conv"]:
        wt = np.asarray(layer["w"], np.float32)        # (Cout, Cin, 3, 3)
        b = np.asarray(layer["b"], np.float32)
        s = int(layer["stride"])
        Cout = wt.shape[0]
        Ho = (H - 1) // s + 1
        Wo = (W - 1) // s + 1
        S = jnp.asarray(_build_row_select(H, Ho, s), jnp.bfloat16)
        M = jnp.asarray(_build_lowered_weight(wt, W, Wo, s), jnp.bfloat16)
        brow = jnp.asarray(np.tile(b, Wo).reshape(1, Wo * Cout), jnp.float32)
        prep["conv"].append((S, M, brow))
        prep["layer_dims"].append((Ho, Wo, Cout))
        H, W = Ho, Wo

    Cf = prep["layer_dims"][-1][2]
    feat = down * down * Cf

    def _perm(w_t):                                    # (L, feat) torch (c,h,w) order
        w_np = np.asarray(w_t, np.float32).reshape(L, Cf, down, down)
        return w_np.transpose(2, 3, 1, 0).reshape(feat, L)   # rows in (h, w, c) order

    wh = np.concatenate([_perm(params["fc_mean"]["w"]),
                         _perm(params["fc_logvar"]["w"])], axis=1)   # (feat, 2L)
    bh = np.concatenate([np.asarray(params["fc_mean"]["b"], np.float32),
                         np.asarray(params["fc_logvar"]["b"], np.float32)])
    prep["w_heads"] = jnp.asarray(wh, jnp.bfloat16)
    prep["b_heads"] = jnp.asarray(bh.reshape(1, 2 * L), jnp.float32)
    return prep


# ----------------------------------------------------------------------------
# Forward pass: one fused pallas_call for the whole encoder.
# ----------------------------------------------------------------------------
def encoder_forward(prep, x_nchw):
    N, C, H, W = x_nchw.shape
    L2 = prep["w_heads"].shape[1]
    layer_dims = tuple(tuple(d) for d in prep["layer_dims"])
    down = prep["meta"]["down_size"]

    # NCHW -> row layout (H, W*C), bf16.  Only relayout in the whole forward.
    x = jnp.transpose(x_nchw, (0, 2, 3, 1)).reshape(N, H, W * C).astype(jnp.bfloat16)

    inputs = [x]
    in_specs = [pl.BlockSpec((1, H, W * C), lambda n: (n, 0, 0))]
    for (S, M, brow) in prep["conv"]:
        inputs += [S, M, brow]
        in_specs += [pl.BlockSpec(S.shape, lambda n: (0, 0)),
                     pl.BlockSpec(M.shape, lambda n: (0, 0, 0)),
                     pl.BlockSpec(brow.shape, lambda n: (0, 0))]
    inputs += [prep["w_heads"], prep["b_heads"]]
    in_specs += [pl.BlockSpec(prep["w_heads"].shape, lambda n: (0, 0)),
                 pl.BlockSpec(prep["b_heads"].shape, lambda n: (0, 0))]

    kernel = functools.partial(_encoder_kernel, layer_dims=layer_dims,
                               down_size=down, latent2=L2)
    out = pl.pallas_call(
        kernel,
        out_shape=jax.ShapeDtypeStruct((N, 1, L2), jnp.float32),
        grid=(N,),
        in_specs=in_specs,
        out_specs=pl.BlockSpec((1, 1, L2), lambda n: (n, 0, 0)),
        compiler_params=pltpu.CompilerParams(dimension_semantics=("parallel",)),
    )(*inputs)

    out = out.reshape(N, L2)
    L = L2 // 2
    return out[:, :L], out[:, L:]


# ----------------------------------------------------------------------------
# Pure-JAX reference (same bf16 matmul inputs / f32 accumulation) for checking.
# ----------------------------------------------------------------------------
def encoder_reference(params, x_nchw):
    x = x_nchw
    for layer in params["conv"]:
        s = int(layer["stride"])
        x = lax.conv_general_dilated(
            x.astype(jnp.bfloat16), layer["w"].astype(jnp.bfloat16),
            window_strides=(s, s), padding=((1, 1), (1, 1)),
            dimension_numbers=("NCHW", "OIHW", "NCHW"),
            preferred_element_type=jnp.float32)
        x = jnp.maximum(x + layer["b"].reshape(1, -1, 1, 1), 0.0)
    flat = x.reshape(x.shape[0], -1)

    def head(p):
        return (jnp.dot(flat.astype(jnp.bfloat16), p["w"].T.astype(jnp.bfloat16),
                        preferred_element_type=jnp.float32) + p["b"])

    return head(params["fc_mean"]), head(params["fc_logvar"])


if __name__ == "__main__":
    image_size = 16
    image_channels = 4
    latent_dim = 32
    batch = 2

    key = jax.random.PRNGKey(0)
    key, kx = jax.random.split(key)
    x = jax.random.normal(kx, (batch, image_channels, image_size, image_size),
                          jnp.float32)                 # NCHW, like PyTorch

    params = init_encoder_params(key, image_size, image_channels, latent_dim)
    prep = prepare_encoder(params)

    fwd = jax.jit(functools.partial(encoder_forward, prep))
    mean, logvar = fwd(x)
    jax.block_until_ready(mean)
    jax.block_until_ready(logvar)

    assert mean.shape == (batch, latent_dim)
    assert logvar.shape == (batch, latent_dim)

    # Correctness check against the pure-JAX reference (same bf16/f32 regime).
    ref_mean, ref_logvar = encoder_reference(params, x)
    np.testing.assert_allclose(np.asarray(mean), np.asarray(ref_mean),
                               rtol=5e-3, atol=5e-3)
    np.testing.assert_allclose(np.asarray(logvar), np.asarray(ref_logvar),
                               rtol=5e-3, atol=5e-3)

    print("KERNEL_OK")
</pallas_src>

<mosaic_0001>
module attributes {stable_mosaic.version = 11 : i64} {
  func.func @_encoder_kernel(%arg0: i32, %arg1: memref<1x16x64xbf16, #tpu.memory_space<vmem>>, %arg2: memref<48x16xbf16, #tpu.memory_space<vmem>>, %arg3: memref<3x64x256xbf16, #tpu.memory_space<vmem>>, %arg4: memref<1x256xf32, #tpu.memory_space<vmem>>, %arg5: memref<24x16xbf16, #tpu.memory_space<vmem>>, %arg6: memref<3x256x256xbf16, #tpu.memory_space<vmem>>, %arg7: memref<1x256xf32, #tpu.memory_space<vmem>>, %arg8: memref<12x8xbf16, #tpu.memory_space<vmem>>, %arg9: memref<3x256x256xbf16, #tpu.memory_space<vmem>>, %arg10: memref<1x256xf32, #tpu.memory_space<vmem>>, %arg11: memref<1024x64xbf16, #tpu.memory_space<vmem>>, %arg12: memref<1x64xf32, #tpu.memory_space<vmem>>, %arg13: memref<1x1x64xf32, #tpu.memory_space<vmem>>) attributes {dimension_semantics = [#tpu.dimension_semantics<parallel>], iteration_bounds = array<i64: 2>, scalar_prefetch = 0 : i64, scratch_operands = 0 : i64, tpu.core_type = #tpu.core_type<tc>, window_params = [{transform_indices = @transform_0, window_bounds = array<i64: 1, 16, 64>}, {pipeline_mode = #tpu.pipeline_mode<synchronous>, transform_indices = @transform_1, window_bounds = array<i64: 48, 16>}, {pipeline_mode = #tpu.pipeline_mode<synchronous>, transform_indices = @transform_2, window_bounds = array<i64: 3, 64, 256>}, {pipeline_mode = #tpu.pipeline_mode<synchronous>, transform_indices = @transform_3, window_bounds = array<i64: 1, 256>}, {pipeline_mode = #tpu.pipeline_mode<synchronous>, transform_indices = @transform_4, window_bounds = array<i64: 24, 16>}, {pipeline_mode = #tpu.pipeline_mode<synchronous>, transform_indices = @transform_5, window_bounds = array<i64: 3, 256, 256>}, {pipeline_mode = #tpu.pipeline_mode<synchronous>, transform_indices = @transform_6, window_bounds = array<i64: 1, 256>}, {pipeline_mode = #tpu.pipeline_mode<synchronous>, transform_indices = @transform_7, window_bounds = array<i64: 12, 8>}, {pipeline_mode = #tpu.pipeline_mode<synchronous>, transform_indices = @transform_8, window_bounds = array<i64: 3, 256, 256>}, {pipeline_mode = #tpu.pipeline_mode<synchronous>, transform_indices = @transform_9, window_bounds = array<i64: 1, 256>}, {pipeline_mode = #tpu.pipeline_mode<synchronous>, transform_indices = @transform_10, window_bounds = array<i64: 1024, 64>}, {pipeline_mode = #tpu.pipeline_mode<synchronous>, transform_indices = @transform_11, window_bounds = array<i64: 1, 64>}, {transform_indices = @transform_12, window_bounds = array<i64: 1, 1, 64>}]} {
    %c0 = arith.constant 0 : index
    %c0_0 = arith.constant 0 : index
    %c0_1 = arith.constant 0 : index
    %0 = vector.load %arg1[%c0, %c0_0, %c0_1] : memref<1x16x64xbf16, #tpu.memory_space<vmem>>, vector<1x16x64xbf16>
    %1 = vector.shape_cast %0 : vector<1x16x64xbf16> to vector<16x64xbf16>
    %c0_2 = arith.constant 0 : index
    %c0_3 = arith.constant 0 : index
    %2 = vector.load %arg2[%c0_2, %c0_3] : memref<48x16xbf16, #tpu.memory_space<vmem>>, vector<48x16xbf16>
    %cst = arith.constant dense<0.000000e+00> : vector<48x64xf32>
    %3 = tpu.matmul %2, %1, %cst {dimension_numbers = #tpu.dot_dimension_numbers<[1], [0], [0], [1], [0, 0, 1, 1], [], []>} : vector<48x16xbf16>, vector<16x64xbf16>, vector<48x64xf32> -> vector<48x64xf32>
    %4 = vector.extract_strided_slice %3 {offsets = [0, 0], sizes = [16, 64], strides = [1, 1]} : vector<48x64xf32> to vector<16x64xf32>
    %5 = arith.truncf %4 : vector<16x64xf32> to vector<16x64xbf16>
    %c0_4 = arith.constant 0 : index
    %c0_5 = arith.constant 0 : index
    %c0_6 = arith.constant 0 : index
    %6 = vector.load %arg3[%c0_4, %c0_5, %c0_6] : memref<3x64x256xbf16, #tpu.memory_space<vmem>>, vector<1x64x256xbf16>
    %7 = vector.shape_cast %6 : vector<1x64x256xbf16> to vector<64x256xbf16>
    %cst_7 = arith.constant dense<0.000000e+00> : vector<16x256xf32>
    %8 = tpu.matmul %5, %7, %cst_7 {dimension_numbers = #tpu.dot_dimension_numbers<[1], [0], [0], [1], [0, 0, 1, 1], [], []>} : vector<16x64xbf16>, vector<64x256xbf16>, vector<16x256xf32> -> vector<16x256xf32>
    %9 = vector.extract_strided_slice %3 {offsets = [16, 0], sizes = [16, 64], strides = [1, 1]} : vector<48x64xf32> to vector<16x64xf32>
    %10 = arith.truncf %9 : vector<16x64xf32> to vector<16x64xbf16>
    %c1 = arith.constant 1 : index
    %c0_8 = arith.constant 0 : index
    %c0_9 = arith.constant 0 : index
    %11 = vector.load %arg3[%c1, %c0_8, %c0_9] : memref<3x64x256xbf16, #tpu.memory_space<vmem>>, vector<1x64x256xbf16>
    %12 = vector.shape_cast %11 : vector<1x64x256xbf16> to vector<64x256xbf16>
    %cst_10 = arith.constant dense<0.000000e+00> : vector<16x256xf32>
    %13 = tpu.matmul %10, %12, %cst_10 {dimension_numbers = #tpu.dot_dimension_numbers<[1], [0], [0], [1], [0, 0, 1, 1], [], []>} : vector<16x64xbf16>, vector<64x256xbf16>, vector<16x256xf32> -> vector<16x256xf32>
    %14 = arith.addf %8, %13 : vector<16x256xf32>
    %15 = vector.extract_strided_slice %3 {offsets = [32, 0], sizes = [16, 64], strides = [1, 1]} : vector<48x64xf32> to vector<16x64xf32>
    %16 = arith.truncf %15 : vector<16x64xf32> to vector<16x64xbf16>
    %c2 = arith.constant 2 : index
    %c0_11 = arith.constant 0 : index
    %c0_12 = arith.constant 0 : index
    %17 = vector.load %arg3[%c2, %c0_11, %c0_12] : memref<3x64x256xbf16, #tpu.memory_space<vmem>>, vector<1x64x256xbf16>
    %18 = vector.shape_cast %17 : vector<1x64x256xbf16> to vector<64x256xbf16>
    %cst_13 = arith.constant dense<0.000000e+00> : vector<16x256xf32>
    %19 = tpu.matmul %16, %18, %cst_13 {dimension_numbers = #tpu.dot_dimension_numbers<[1], [0], [0], [1], [0, 0, 1, 1], [], []>} : vector<16x64xbf16>, vector<64x256xbf16>, vector<16x256xf32> -> vector<16x256xf32>
    %20 = arith.addf %14, %19 : vector<16x256xf32>
    %c0_14 = arith.constant 0 : index
    %c0_15 = arith.constant 0 : index
    %21 = vector.load %arg4[%c0_14, %c0_15] : memref<1x256xf32, #tpu.memory_space<vmem>>, vector<1x256xf32>
    %22 = vector.broadcast %21 : vector<1x256xf32> to vector<16x256xf32>
    %23 = arith.addf %20, %22 : vector<16x256xf32>
    %cst_16 = arith.constant 0.000000e+00 : f32
    %24 = vector.broadcast %cst_16 : f32 to vector<16x256xf32>
    %25 = arith.maximumf %23, %24 : vector<16x256xf32>
    %c0_17 = arith.constant 0 : index
    %c0_18 = arith.constant 0 : index
    %26 = vector.load %arg5[%c0_17, %c0_18] : memref<24x16xbf16, #tpu.memory_space<vmem>>, vector<24x16xbf16>
    %27 = arith.truncf %25 : vector<16x256xf32> to vector<16x256xbf16>
    %cst_19 = arith.constant dense<0.000000e+00> : vector<24x256xf32>
    %28 = tpu.matmul %26, %27, %cst_19 {dimension_numbers = #tpu.dot_dimension_numbers<[1], [0], [0], [1], [0, 0, 1, 1], [], []>} : vector<24x16xbf16>, vector<16x256xbf16>, vector<24x256xf32> -> vector<24x256xf32>
    %29 = vector.extract_strided_slice %28 {offsets = [0, 0], sizes = [8, 256], strides = [1, 1]} : vector<24x256xf32> to vector<8x256xf32>
    %30 = arith.truncf %29 : vector<8x256xf32> to vector<8x256xbf16>
    %c0_20 = arith.constant 0 : index
    %c0_21 = arith.constant 0 : index
    %c0_22 = arith.constant 0 : index
    %31 = vector.load %arg6[%c0_20, %c0_21, %c0_22] : memref<3x256x256xbf16, #tpu.memory_space<vmem>>, vector<1x256x256xbf16>
    %32 = vector.shape_cast %31 : vector<1x256x256xbf16> to vector<256x256xbf16>
    %cst_23 = arith.constant dense<0.000000e+00> : vector<8x256xf32>
    %33 = tpu.matmul %30, %32, %cst_23 {dimension_numbers = #tpu.dot_dimension_numbers<[1], [0], [0], [1], [0, 0, 1, 1], [], []>} : vector<8x256xbf16>, vector<256x256xbf16>, vector<8x256xf32> -> vector<8x256xf32>
    %34 = vector.extract_strided_slice %28 {offsets = [8, 0], sizes = [8, 256], strides = [1, 1]} : vector<24x256xf32> to vector<8x256xf32>
    %35 = arith.truncf %34 : vector<8x256xf32> to vector<8x256xbf16>
    %c1_24 = arith.constant 1 : index
    %c0_25 = arith.constant 0 : index
    %c0_26 = arith.constant 0 : index
    %36 = vector.load %arg6[%c1_24, %c0_25, %c0_26] : memref<3x256x256xbf16, #tpu.memory_space<vmem>>, vector<1x256x256xbf16>
    %37 = vector.shape_cast %36 : vector<1x256x256xbf16> to vector<256x256xbf16>
    %cst_27 = arith.constant dense<0.000000e+00> : vector<8x256xf32>
    %38 = tpu.matmul %35, %37, %cst_27 {dimension_numbers = #tpu.dot_dimension_numbers<[1], [0], [0], [1], [0, 0, 1, 1], [], []>} : vector<8x256xbf16>, vector<256x256xbf16>, vector<8x256xf32> -> vector<8x256xf32>
    %39 = arith.addf %33, %38 : vector<8x256xf32>
    %40 = vector.extract_strided_slice %28 {offsets = [16, 0], sizes = [8, 256], strides = [1, 1]} : vector<24x256xf32> to vector<8x256xf32>
    %41 = arith.truncf %40 : vector<8x256xf32> to vector<8x256xbf16>
    %c2_28 = arith.constant 2 : index
    %c0_29 = arith.constant 0 : index
    %c0_30 = arith.constant 0 : index
    %42 = vector.load %arg6[%c2_28, %c0_29, %c0_30] : memref<3x256x256xbf16, #tpu.memory_space<vmem>>, vector<1x256x256xbf16>
    %43 = vector.shape_cast %42 : vector<1x256x256xbf16> to vector<256x256xbf16>
    %cst_31 = arith.constant dense<0.000000e+00> : vector<8x256xf32>
    %44 = tpu.matmul %41, %43, %cst_31 {dimension_numbers = #tpu.dot_dimension_numbers<[1], [0], [0], [1], [0, 0, 1, 1], [], []>} : vector<8x256xbf16>, vector<256x256xbf16>, vector<8x256xf32> -> vector<8x256xf32>
    %45 = arith.addf %39, %44 : vector<8x256xf32>
    %c0_32 = arith.constant 0 : index
    %c0_33 = arith.constant 0 : index
    %46 = vector.load %arg7[%c0_32, %c0_33] : memref<1x256xf32, #tpu.memory_space<vmem>>, vector<1x256xf32>
    %47 = vector.broadcast %46 : vector<1x256xf32> to vector<8x256xf32>
    %48 = arith.addf %45, %47 : vector<8x256xf32>
    %cst_34 = arith.constant 0.000000e+00 : f32
    %49 = vector.broadcast %cst_34 : f32 to vector<8x256xf32>
    %50 = arith.maximumf %48, %49 : vector<8x256xf32>
    %c0_35 = arith.constant 0 : index
    %c0_36 = arith.constant 0 : index
    %51 = vector.load %arg8[%c0_35, %c0_36] : memref<12x8xbf16, #tpu.memory_space<vmem>>, vector<12x8xbf16>
    %52 = arith.truncf %50 : vector<8x256xf32> to vector<8x256xbf16>
    %cst_37 = arith.constant dense<0.000000e+00> : vector<12x256xf32>
    %53 = tpu.matmul %51, %52, %cst_37 {dimension_numbers = #tpu.dot_dimension_numbers<[1], [0], [0], [1], [0, 0, 1, 1], [], []>} : vector<12x8xbf16>, vector<8x256xbf16>, vector<12x256xf32> -> vector<12x256xf32>
    %54 = vector.extract_strided_slice %53 {offsets = [0, 0], sizes = [4, 256], strides = [1, 1]} : vector<12x256xf32> to vector<4x256xf32>
    %55 = arith.truncf %54 : vector<4x256xf32> to vector<4x256xbf16>
    %c0_38 = arith.constant 0 : index
    %c0_39 = arith.constant 0 : index
    %c0_40 = arith.constant 0 : index
    %56 = vector.load %arg9[%c0_38, %c0_39, %c0_40] : memref<3x256x256xbf16, #tpu.memory_space<vmem>>, vector<1x256x256xbf16>
    %57 = vector.shape_cast %56 : vector<1x256x256xbf16> to vector<256x256xbf16>
    %cst_41 = arith.constant dense<0.000000e+00> : vector<4x256xf32>
    %58 = tpu.matmul %55, %57, %cst_41 {dimension_numbers = #tpu.dot_dimension_numbers<[1], [0], [0], [1], [0, 0, 1, 1], [], []>} : vector<4x256xbf16>, vector<256x256xbf16>, vector<4x256xf32> -> vector<4x256xf32>
    %59 = vector.extract_strided_slice %53 {offsets = [4, 0], sizes = [4, 256], strides = [1, 1]} : vector<12x256xf32> to vector<4x256xf32>
    %60 = arith.truncf %59 : vector<4x256xf32> to vector<4x256xbf16>
    %c1_42 = arith.constant 1 : index
    %c0_43 = arith.constant 0 : index
    %c0_44 = arith.constant 0 : index
    %61 = vector.load %arg9[%c1_42, %c0_43, %c0_44] : memref<3x256x256xbf16, #tpu.memory_space<vmem>>, vector<1x256x256xbf16>
    %62 = vector.shape_cast %61 : vector<1x256x256xbf16> to vector<256x256xbf16>
    %cst_45 = arith.constant dense<0.000000e+00> : vector<4x256xf32>
    %63 = tpu.matmul %60, %62, %cst_45 {dimension_numbers = #tpu.dot_dimension_numbers<[1], [0], [0], [1], [0, 0, 1, 1], [], []>} : vector<4x256xbf16>, vector<256x256xbf16>, vector<4x256xf32> -> vector<4x256xf32>
    %64 = arith.addf %58, %63 : vector<4x256xf32>
    %65 = vector.extract_strided_slice %53 {offsets = [8, 0], sizes = [4, 256], strides = [1, 1]} : vector<12x256xf32> to vector<4x256xf32>
    %66 = arith.truncf %65 : vector<4x256xf32> to vector<4x256xbf16>
    %c2_46 = arith.constant 2 : index
    %c0_47 = arith.constant 0 : index
    %c0_48 = arith.constant 0 : index
    %67 = vector.load %arg9[%c2_46, %c0_47, %c0_48] : memref<3x256x256xbf16, #tpu.memory_space<vmem>>, vector<1x256x256xbf16>
    %68 = vector.shape_cast %67 : vector<1x256x256xbf16> to vector<256x256xbf16>
    %cst_49 = arith.constant dense<0.000000e+00> : vector<4x256xf32>
    %69 = tpu.matmul %66, %68, %cst_49 {dimension_numbers = #tpu.dot_dimension_numbers<[1], [0], [0], [1], [0, 0, 1, 1], [], []>} : vector<4x256xbf16>, vector<256x256xbf16>, vector<4x256xf32> -> vector<4x256xf32>
    %70 = arith.addf %64, %69 : vector<4x256xf32>
    %c0_50 = arith.constant 0 : index
    %c0_51 = arith.constant 0 : index
    %71 = vector.load %arg10[%c0_50, %c0_51] : memref<1x256xf32, #tpu.memory_space<vmem>>, vector<1x256xf32>
    %72 = vector.broadcast %71 : vector<1x256xf32> to vector<4x256xf32>
    %73 = arith.addf %70, %72 : vector<4x256xf32>
    %cst_52 = arith.constant 0.000000e+00 : f32
    %74 = vector.broadcast %cst_52 : f32 to vector<4x256xf32>
    %75 = arith.maximumf %73, %74 : vector<4x256xf32>
    %76 = vector.extract_strided_slice %75 {offsets = [0, 0], sizes = [1, 256], strides = [1, 1]} : vector<4x256xf32> to vector<1x256xf32>
    %77 = arith.truncf %76 : vector<1x256xf32> to vector<1x256xbf16>
    %c0_53 = arith.constant 0 : index
    %c0_54 = arith.constant 0 : index
    %78 = vector.load %arg11[%c0_53, %c0_54] : memref<1024x64xbf16, #tpu.memory_space<vmem>>, vector<256x64xbf16>
    %cst_55 = arith.constant dense<0.000000e+00> : vector<1x64xf32>
    %79 = tpu.matmul %77, %78, %cst_55 {dimension_numbers = #tpu.dot_dimension_numbers<[1], [0], [0], [1], [0, 0, 1, 1], [], []>} : vector<1x256xbf16>, vector<256x64xbf16>, vector<1x64xf32> -> vector<1x64xf32>
    %80 = vector.extract_strided_slice %75 {offsets = [1, 0], sizes = [1, 256], strides = [1, 1]} : vector<4x256xf32> to vector<1x256xf32>
    %81 = arith.truncf %80 : vector<1x256xf32> to vector<1x256xbf16>
    %c256 = arith.constant 256 : index
    %c0_56 = arith.constant 0 : index
    %82 = vector.load %arg11[%c256, %c0_56] : memref<1024x64xbf16, #tpu.memory_space<vmem>>, vector<256x64xbf16>
    %cst_57 = arith.constant dense<0.000000e+00> : vector<1x64xf32>
    %83 = tpu.matmul %81, %82, %cst_57 {dimension_numbers = #tpu.dot_dimension_numbers<[1], [0], [0], [1], [0, 0, 1, 1], [], []>} : vector<1x256xbf16>, vector<256x64xbf16>, vector<1x64xf32> -> vector<1x64xf32>
    %84 = arith.addf %79, %83 : vector<1x64xf32>
    %85 = vector.extract_strided_slice %75 {offsets = [2, 0], sizes = [1, 256], strides = [1, 1]} : vector<4x256xf32> to vector<1x256xf32>
    %86 = arith.truncf %85 : vector<1x256xf32> to vector<1x256xbf16>
    %c512 = arith.constant 512 : index
    %c0_58 = arith.constant 0 : index
    %87 = vector.load %arg11[%c512, %c0_58] : memref<1024x64xbf16, #tpu.memory_space<vmem>>, vector<256x64xbf16>
    %cst_59 = arith.constant dense<0.000000e+00> : vector<1x64xf32>
    %88 = tpu.matmul %86, %87, %cst_59 {dimension_numbers = #tpu.dot_dimension_numbers<[1], [0], [0], [1], [0, 0, 1, 1], [], []>} : vector<1x256xbf16>, vector<256x64xbf16>, vector<1x64xf32> -> vector<1x64xf32>
    %89 = arith.addf %84, %88 : vector<1x64xf32>
    %90 = vector.extract_strided_slice %75 {offsets = [3, 0], sizes = [1, 256], strides = [1, 1]} : vector<4x256xf32> to vector<1x256xf32>
    %91 = arith.truncf %90 : vector<1x256xf32> to vector<1x256xbf16>
    %c768 = arith.constant 768 : index
    %c0_60 = arith.constant 0 : index
    %92 = vector.load %arg11[%c768, %c0_60] : memref<1024x64xbf16, #tpu.memory_space<vmem>>, vector<256x64xbf16>
    %cst_61 = arith.constant dense<0.000000e+00> : vector<1x64xf32>
    %93 = tpu.matmul %91, %92, %cst_61 {dimension_numbers = #tpu.dot_dimension_numbers<[1], [0], [0], [1], [0, 0, 1, 1], [], []>} : vector<1x256xbf16>, vector<256x64xbf16>, vector<1x64xf32> -> vector<1x64xf32>
    %94 = arith.addf %89, %93 : vector<1x64xf32>
    %c0_62 = arith.constant 0 : index
    %c0_63 = arith.constant 0 : index
    %95 = vector.load %arg12[%c0_62, %c0_63] : memref<1x64xf32, #tpu.memory_space<vmem>>, vector<1x64xf32>
    %96 = arith.addf %94, %95 : vector<1x64xf32>
    %c0_64 = arith.constant 0 : index
    %c0_65 = arith.constant 0 : index
    %c0_66 = arith.constant 0 : index
    %97 = vector.load %arg13[%c0_64, %c0_65, %c0_66] : memref<1x1x64xf32, #tpu.memory_space<vmem>>, vector<1x1x64xf32>
    %98 = vector.shape_cast %97 : vector<1x1x64xf32> to vector<1x64xf32>
    %99 = vector.shape_cast %96 : vector<1x64xf32> to vector<1x1x64xf32>
    tpu.vector_store %arg13[%c0_64, %c0_65, %c0_66], %99 {strides = array<i32>} : memref<1x1x64xf32, #tpu.memory_space<vmem>>, vector<1x1x64xf32>,
    return
  }
  func.func @transform_0(%arg0: i32) -> (i32, i32, i32) {
    %c0_i32 = arith.constant 0 : i32
    %c0_i32_0 = arith.constant 0 : i32
    %c0_i32_1 = arith.constant 0 : i32
    return %arg0, %c0_i32, %c0_i32_0 : i32, i32, i32
  }
  func.func @transform_1(%arg0: i32) -> (i32, i32) {
    %c0_i32 = arith.constant 0 : i32
    %c0_i32_0 = arith.constant 0 : i32
    %c0_i32_1 = arith.constant 0 : i32
    return %c0_i32, %c0_i32_0 : i32, i32
  }
  func.func @transform_2(%arg0: i32) -> (i32, i32, i32) {
    %c0_i32 = arith.constant 0 : i32
    %c0_i32_0 = arith.constant 0 : i32
    %c0_i32_1 = arith.constant 0 : i32
    %c0_i32_2 = arith.constant 0 : i32
    return %c0_i32, %c0_i32_0, %c0_i32_1 : i32, i32, i32
  }
  func.func @transform_3(%arg0: i32) -> (i32, i32) {
    %c0_i32 = arith.constant 0 : i32
    %c0_i32_0 = arith.constant 0 : i32
    %c0_i32_1 = arith.constant 0 : i32
    return %c0_i32, %c0_i32_0 : i32, i32
  }
  func.func @transform_4(%arg0: i32) -> (i32, i32) {
    %c0_i32 = arith.constant 0 : i32
    %c0_i32_0 = arith.constant 0 : i32
    %c0_i32_1 = arith.constant 0 : i32
    return %c0_i32, %c0_i32_0 : i32, i32
  }
  func.func @transform_5(%arg0: i32) -> (i32, i32, i32) {
    %c0_i32 = arith.constant 0 : i32
    %c0_i32_0 = arith.constant 0 : i32
    %c0_i32_1 = arith.constant 0 : i32
    %c0_i32_2 = arith.constant 0 : i32
    return %c0_i32, %c0_i32_0, %c0_i32_1 : i32, i32, i32
  }
  func.func @transform_6(%arg0: i32) -> (i32, i32) {
    %c0_i32 = arith.constant 0 : i32
    %c0_i32_0 = arith.constant 0 : i32
    %c0_i32_1 = arith.constant 0 : i32
    return %c0_i32, %c0_i32_0 : i32, i32
  }
  func.func @transform_7(%arg0: i32) -> (i32, i32) {
    %c0_i32 = arith.constant 0 : i32
    %c0_i32_0 = arith.constant 0 : i32
    %c0_i32_1 = arith.constant 0 : i32
    return %c0_i32, %c0_i32_0 : i32, i32
  }
  func.func @transform_8(%arg0: i32) -> (i32, i32, i32) {
    %c0_i32 = arith.constant 0 : i32
    %c0_i32_0 = arith.constant 0 : i32
    %c0_i32_1 = arith.constant 0 : i32
    %c0_i32_2 = arith.constant 0 : i32
    return %c0_i32, %c0_i32_0, %c0_i32_1 : i32, i32, i32
  }
  func.func @transform_9(%arg0: i32) -> (i32, i32) {
    %c0_i32 = arith.constant 0 : i32
    %c0_i32_0 = arith.constant 0 : i32
    %c0_i32_1 = arith.constant 0 : i32
    return %c0_i32, %c0_i32_0 : i32, i32
  }
  func.func @transform_10(%arg0: i32) -> (i32, i32) {
    %c0_i32 = arith.constant 0 : i32
    %c0_i32_0 = arith.constant 0 : i32
    %c0_i32_1 = arith.constant 0 : i32
    return %c0_i32, %c0_i32_0 : i32, i32
  }
  func.func @transform_11(%arg0: i32) -> (i32, i32) {
    %c0_i32 = arith.constant 0 : i32
    %c0_i32_0 = arith.constant 0 : i32
    %c0_i32_1 = arith.constant 0 : i32
    return %c0_i32, %c0_i32_0 : i32, i32
  }
  func.func @transform_12(%arg0: i32) -> (i32, i32, i32) {
    %c0_i32 = arith.constant 0 : i32
    %c0_i32_0 = arith.constant 0 : i32
    %c0_i32_1 = arith.constant 0 : i32
    return %arg0, %c0_i32, %c0_i32_0 : i32, i32, i32
  }
}

</mosaic_0001>

<llo_original>
// kernel: encoder_forward.1
$region0: #{encoder_forward.1}
  #allocation0 [shape = 'u32[]', space=smem, size = 0x4, offset = 0x4, fixed_abs, tag = 'smem constant byte address 0x4 - core index']
  #allocation1 [shape = 'u32[72,128]{1,0:T(1,128)}', space=vmem, size = 0x9000, scoped, tag = 'internal scratch']
  %s0 = inlined_call_operand.vmem [shape: bf16[2,16,64], index: 0, kind: input, shape index: {}]
  %s1 = inlined_call_operand.vmem [shape: bf16[48,16], index: 1, kind: input, shape index: {}]
  %s2 = inlined_call_operand.vmem [shape: bf16[3,64,256], index: 2, kind: input, shape index: {}]
  %s3 = inlined_call_operand.vmem [shape: f32[1,256], index: 3, kind: input, shape index: {}]
  %s4 = inlined_call_operand.vmem [shape: bf16[24,16], index: 4, kind: input, shape index: {}]
  %s5 = inlined_call_operand.hbm [shape: bf16[3,256,256], index: 5, kind: input, shape index: {}]
  %s6 = inlined_call_operand.vmem [shape: f32[1,256], index: 6, kind: input, shape index: {}]
  %s7 = inlined_call_operand.vmem [shape: bf16[12,8], index: 7, kind: input, shape index: {}]
  %s8 = inlined_call_operand.hbm [shape: bf16[3,256,256], index: 8, kind: input, shape index: {}]
  %s9 = inlined_call_operand.vmem [shape: f32[1,256], index: 9, kind: input, shape index: {}]
  %s10 = inlined_call_operand.hbm [shape: bf16[1024,64], index: 10, kind: input, shape index: {}]
  %s11 = inlined_call_operand.vmem [shape: f32[1,64], index: 11, kind: input, shape index: {}]
  %s12 = inlined_call_operand.vmem [shape: f32[2,1,64], index: 12, kind: output, shape index: {}]
  %s13 = sld [smem:[#allocation0]]
  $region93: #{encoder_forward.1} parent=0
    _
  %s15 = ssub.s32 1, %s13
  %s16 = scalar_select 0, %s15, %s13
  $region1: #{encoder_forward.1} parent=0
    #allocation2 [shape = 'u8[393216]{0}', space=vmem, size = 0x60000, scoped, tag = 'input window, operand 5, single buffered']
    #allocation3 [shape = 's32[2]{0}', space=sflag, size = 0x8, scoped, tag = 'scoped memory for encoder_forward.1']
    #allocation4 [shape = 'u8[393216]{0}', space=vmem, size = 0x60000, scoped, tag = 'input window, operand 8, single buffered']
    #allocation5 [shape = 's32[1]{0}', space=sflag, size = 0x4, scoped, tag = 'scoped memory for encoder_forward.1']
    #allocation6 [shape = 'u8[262144]{0}', space=vmem, size = 0x40000, scoped, tag = 'input window, operand 10, single buffered']
    %17 = vsyncpa [#allocation3], 0
    %18 = vsyncpa [#allocation5], 0
    loop: start=0, step=1, limit=4
    $region2: #{encoder_forward.1} parent=1 // loop_pre_header
      _
    $region3: #{encoder_forward.1} parent=1 // loop_header
      %s20 = sphi 0, %s24
      %p21 = scmp.ge.s32.totalorder %s20, 4
      %s30 = sphi 0, %s32
      %s33 = sphi 0, %s30
      %s34 = sphi 0, %s33
      %s50 = sphi 0, %s34
      %s54 = sphi 0, %s54
      %s56 = sphi 0, %s54
      %s57 = sphi 0, %s56
      %s71 = sphi 0, %s57
      %s75 = sphi 0, %s75
      %s77 = sphi 0, %s75
      %s78 = sphi 0, %s77
      %s92 = sphi 0, %s78
      %s96 = sphi 0, %s96
      %s98 = sphi 0, %s96
      %s99 = sphi 0, %s98
      %s113 = sphi 0, %s99
      %s117 = sphi 0, %s117
      %s119 = sphi 0, %s117
      %s120 = sphi 0, %s119
      %s134 = sphi 0, %s120
      %s138 = sphi 0, %s138
      %s140 = sphi 0, %s138
      %s141 = sphi 0, %s140
      %s155 = sphi 0, %s141
      %s159 = sphi 0, %s159
      %s161 = sphi 0, %s159
      %s162 = sphi 0, %s161
      %s176 = sphi 0, %s162
      %s180 = sphi 0, %s180
      %s182 = sphi 0, %s180
      %s183 = sphi 0, %s182
      %s197 = sphi 0, %s183
      %s201 = sphi 0, %s201
      %s203 = sphi 0, %s201
      %s204 = sphi 0, %s203
      %s218 = sphi 0, %s204
      %s222 = sphi 0, %s222
      %s224 = sphi 0, %s222
      %s225 = sphi 0, %s224
      %s239 = sphi 0, %s225
      %s243 = sphi 0, %s243
      %s245 = sphi 0, %s243
      %s246 = sphi 0, %s245
      %s260 = sphi 0, %s246
      %s264 = sphi 0, %s264
      %s266 = sphi 0, %s264
      %s267 = sphi 0, %s266
      %s281 = sphi 0, %s267
      %s287 = sphi 0, %s289
      %s290 = sphi 0, %s287
      %s291 = sphi 0, %s290
      %s307 = sphi 0, %s291
    $region4: #{encoder_forward.1} parent=1 // loop_header_branch
      %23 = sbr.rel (%p21) target = $region8
    $region5: #{encoder_forward.1} parent=1 // loop_body
      %s25 = ssub.s32 %s20, 1
      %s26 = ssub.s32 %s20, 2
      %s27 = sadd.s32 %s20, 1
      %s28 = ssub.s32 %s20, %s27
      %p29 = scmp.eq.s32.totalorder %s28, 0
      %s31 = sadd.s32 %s30, 1
      %s32 = scalar_select %p29, %s30, %s31
      %p35 = pneg %p29
      %p36 = scmp.eq.s32.totalorder %s20, 1
      %p37 = por %p35, %p36
      %p38 = scmp.ne.s32.totalorder %s30, %s33
      %p39 = scmp.eq.s32.totalorder %s20, 0
      %p40 = por %p38, %p39
      %p41 = scmp.ne.s32.totalorder %s30, %s33
      %p42 = scmp.eq.s32.totalorder %s25, 1
      %p43 = por %p41, %p42
      %p44 = scmp.ne.s32.totalorder %s33, %s34
      %p45 = scmp.eq.s32.totalorder %s25, 0
      %p46 = por %p44, %p45
      %p47 = scmp.ne.s32.totalorder %s33, %s34
      %p48 = scmp.eq.s32.totalorder %s26, 1
      %p49 = por %p47, %p48
      %p51 = scmp.ne.s32.totalorder %s34, %s50
      %p52 = scmp.eq.s32.totalorder %s26, 0
      %p53 = por %p51, %p52
      %s55 = sadd.s32 %s54, 1
      %p58 = scmp.eq.s32.totalorder %s20, 1
      %p59 = scmp.ne.s32.totalorder %s54, %s56
      %p60 = scmp.eq.s32.totalorder %s20, 0
      %p61 = por %p59, %p60
      %p62 = scmp.ne.s32.totalorder %s54, %s56
      %p63 = scmp.eq.s32.totalorder %s25, 1
      %p64 = por %p62, %p63
      %p65 = scmp.ne.s32.totalorder %s56, %s57
      %p66 = scmp.eq.s32.totalorder %s25, 0
      %p67 = por %p65, %p66
      %p68 = scmp.ne.s32.totalorder %s56, %s57
      %p69 = scmp.eq.s32.totalorder %s26, 1
      %p70 = por %p68, %p69
      %p72 = scmp.ne.s32.totalorder %s57, %s71
      %p73 = scmp.eq.s32.totalorder %s26, 0
      %p74 = por %p72, %p73
      %s76 = sadd.s32 %s75, 1
      %p79 = scmp.eq.s32.totalorder %s20, 1
      %p80 = scmp.ne.s32.totalorder %s75, %s77
      %p81 = scmp.eq.s32.totalorder %s20, 0
      %p82 = por %p80, %p81
      %p83 = scmp.ne.s32.totalorder %s75, %s77
      %p84 = scmp.eq.s32.totalorder %s25, 1
      %p85 = por %p83, %p84
      %p86 = scmp.ne.s32.totalorder %s77, %s78
      %p87 = scmp.eq.s32.totalorder %s25, 0
      %p88 = por %p86, %p87
      %p89 = scmp.ne.s32.totalorder %s77, %s78
      %p90 = scmp.eq.s32.totalorder %s26, 1
      %p91 = por %p89, %p90
      %p93 = scmp.ne.s32.totalorder %s78, %s92
      %p94 = scmp.eq.s32.totalorder %s26, 0
      %p95 = por %p93, %p94
      %s97 = sadd.s32 %s96, 1
      %p100 = scmp.eq.s32.totalorder %s20, 1
      %p101 = scmp.ne.s32.totalorder %s96, %s98
      %p102 = scmp.eq.s32.totalorder %s20, 0
      %p103 = por %p101, %p102
      %p104 = scmp.ne.s32.totalorder %s96, %s98
      %p105 = scmp.eq.s32.totalorder %s25, 1
      %p106 = por %p104, %p105
      %p107 = scmp.ne.s32.totalorder %s98, %s99
      %p108 = scmp.eq.s32.totalorder %s25, 0
      %p109 = por %p107, %p108
      %p110 = scmp.ne.s32.totalorder %s98, %s99
      %p111 = scmp.eq.s32.totalorder %s26, 1
      %p112 = por %p110, %p111
      %p114 = scmp.ne.s32.totalorder %s99, %s113
      %p115 = scmp.eq.s32.totalorder %s26, 0
      %p116 = por %p114, %p115
      %s118 = sadd.s32 %s117, 1
      %p121 = scmp.eq.s32.totalorder %s20, 1
      %p122 = scmp.ne.s32.totalorder %s117, %s119
      %p123 = scmp.eq.s32.totalorder %s20, 0
      %p124 = por %p122, %p123
      %p125 = scmp.ne.s32.totalorder %s117, %s119
      %p126 = scmp.eq.s32.totalorder %s25, 1
      %p127 = por %p125, %p126
      %p128 = scmp.ne.s32.totalorder %s119, %s120
      %p129 = scmp.eq.s32.totalorder %s25, 0
      %p130 = por %p128, %p129
      %p131 = scmp.ne.s32.totalorder %s119, %s120
      %p132 = scmp.eq.s32.totalorder %s26, 1
      %p133 = por %p131, %p132
      %p135 = scmp.ne.s32.totalorder %s120, %s134
      %p136 = scmp.eq.s32.totalorder %s26, 0
      %p137 = por %p135, %p136
      %s139 = sadd.s32 %s138, 1
      %p142 = scmp.eq.s32.totalorder %s20, 1
      %p143 = scmp.ne.s32.totalorder %s138, %s140
      %p144 = scmp.eq.s32.totalorder %s20, 0
      %p145 = por %p143, %p144
      %p146 = scmp.ne.s32.totalorder %s138, %s140
      %p147 = scmp.eq.s32.totalorder %s25, 1
      %p148 = por %p146, %p147
      %p149 = scmp.ne.s32.totalorder %s140, %s141
      %p150 = scmp.eq.s32.totalorder %s25, 0
      %p151 = por %p149, %p150
      %p152 = scmp.ne.s32.totalorder %s140, %s141
      %p153 = scmp.eq.s32.totalorder %s26, 1
      %p154 = por %p152, %p153
      %p156 = scmp.ne.s32.totalorder %s141, %s155
      %p157 = scmp.eq.s32.totalorder %s26, 0
      %p158 = por %p156, %p157
      %s160 = sadd.s32 %s159, 1
      %p163 = scmp.eq.s32.totalorder %s20, 1
      %p164 = scmp.ne.s32.totalorder %s159, %s161
      %p165 = scmp.eq.s32.totalorder %s20, 0
      %p166 = por %p164, %p165
      %p167 = scmp.ne.s32.totalorder %s159, %s161
      %p168 = scmp.eq.s32.totalorder %s25, 1
      %p169 = por %p167, %p168
      %p170 = scmp.ne.s32.totalorder %s161, %s162
      %p171 = scmp.eq.s32.totalorder %s25, 0
      %p172 = por %p170, %p171
      %p173 = scmp.ne.s32.totalorder %s161, %s162
      %p174 = scmp.eq.s32.totalorder %s26, 1
      %p175 = por %p173, %p174
      %p177 = scmp.ne.s32.totalorder %s162, %s176
      %p178 = scmp.eq.s32.totalorder %s26, 0
      %p179 = por %p177, %p178
      %s181 = sadd.s32 %s180, 1
      %p184 = scmp.eq.s32.totalorder %s20, 1
      %p185 = scmp.ne.s32.totalorder %s180, %s182
      %p186 = scmp.eq.s32.totalorder %s20, 0
      %p187 = por %p185, %p186
      %p188 = scmp.ne.s32.totalorder %s180, %s182
      %p189 = scmp.eq.s32.totalorder %s25, 1
      %p190 = por %p188, %p189
      %p191 = scmp.ne.s32.totalorder %s182, %s183
      %p192 = scmp.eq.s32.totalorder %s25, 0
      %p193 = por %p191, %p192
      %p194 = scmp.ne.s32.totalorder %s182, %s183
      %p195 = scmp.eq.s32.totalorder %s26, 1
      %p196 = por %p194, %p195
      %p198 = scmp.ne.s32.totalorder %s183, %s197
      %p199 = scmp.eq.s32.totalorder %s26, 0
      %p200 = por %p198, %p199
      %s202 = sadd.s32 %s201, 1
      %p205 = scmp.eq.s32.totalorder %s20, 1
      %p206 = scmp.ne.s32.totalorder %s201, %s203
      %p207 = scmp.eq.s32.totalorder %s20, 0
      %p208 = por %p206, %p207
      %p209 = scmp.ne.s32.totalorder %s201, %s203
      %p210 = scmp.eq.s32.totalorder %s25, 1
      %p211 = por %p209, %p210
      %p212 = scmp.ne.s32.totalorder %s203, %s204
      %p213 = scmp.eq.s32.totalorder %s25, 0
      %p214 = por %p212, %p213
      %p215 = scmp.ne.s32.totalorder %s203, %s204
      %p216 = scmp.eq.s32.totalorder %s26, 1
      %p217 = por %p215, %p216
      %p219 = scmp.ne.s32.totalorder %s204, %s218
      %p220 = scmp.eq.s32.totalorder %s26, 0
      %p221 = por %p219, %p220
      %s223 = sadd.s32 %s222, 1
      %p226 = scmp.eq.s32.totalorder %s20, 1
      %p227 = scmp.ne.s32.totalorder %s222, %s224
      %p228 = scmp.eq.s32.totalorder %s20, 0
      %p229 = por %p227, %p228
      %p230 = scmp.ne.s32.totalorder %s222, %s224
      %p231 = scmp.eq.s32.totalorder %s25, 1
      %p232 = por %p230, %p231
      %p233 = scmp.ne.s32.totalorder %s224, %s225
      %p234 = scmp.eq.s32.totalorder %s25, 0
      %p235 = por %p233, %p234
      %p236 = scmp.ne.s32.totalorder %s224, %s225
      %p237 = scmp.eq.s32.totalorder %s26, 1
      %p238 = por %p236, %p237
      %p240 = scmp.ne.s32.totalorder %s225, %s239
      %p241 = scmp.eq.s32.totalorder %s26, 0
      %p242 = por %p240, %p241
      %s244 = sadd.s32 %s243, 1
      %p247 = scmp.eq.s32.totalorder %s20, 1
      %p248 = scmp.ne.s32.totalorder %s243, %s245
      %p249 = scmp.eq.s32.totalorder %s20, 0
      %p250 = por %p248, %p249
      %p251 = scmp.ne.s32.totalorder %s243, %s245
      %p252 = scmp.eq.s32.totalorder %s25, 1
      %p253 = por %p251, %p252
      %p254 = scmp.ne.s32.totalorder %s245, %s246
      %p255 = scmp.eq.s32.totalorder %s25, 0
      %p256 = por %p254, %p255
      %p257 = scmp.ne.s32.totalorder %s245, %s246
      %p258 = scmp.eq.s32.totalorder %s26, 1
      %p259 = por %p257, %p258
      %p261 = scmp.ne.s32.totalorder %s246, %s260
      %p262 = scmp.eq.s32.totalorder %s26, 0
      %p263 = por %p261, %p262
      %s265 = sadd.s32 %s264, 1
      %p268 = scmp.eq.s32.totalorder %s20, 1
      %p269 = scmp.ne.s32.totalorder %s264, %s266
      %p270 = scmp.eq.s32.totalorder %s20, 0
      %p271 = por %p269, %p270
      %p272 = scmp.ne.s32.totalorder %s264, %s266
      %p273 = scmp.eq.s32.totalorder %s25, 1
      %p274 = por %p272, %p273
      %p275 = scmp.ne.s32.totalorder %s266, %s267
      %p276 = scmp.eq.s32.totalorder %s25, 0
      %p277 = por %p275, %p276
      %p278 = scmp.ne.s32.totalorder %s266, %s267
      %p279 = scmp.eq.s32.totalorder %s26, 1
      %p280 = por %p278, %p279
      %p282 = scmp.ne.s32.totalorder %s267, %s281
      %p283 = scmp.eq.s32.totalorder %s26, 0
      %p284 = por %p282, %p283
      %s285 = ssub.s32 %s20, %s27
      %p286 = scmp.eq.s32.totalorder %s285, 0
      %s288 = sadd.s32 %s287, 1
      %s289 = scalar_select %p286, %s287, %s288
      %p292 = pneg %p286
      %p293 = scmp.eq.s32.totalorder %s20, 1
      %p294 = por %p292, %p293
      %p295 = scmp.ne.s32.totalorder %s287, %s290
      %p296 = scmp.eq.s32.totalorder %s20, 0
      %p297 = por %p295, %p296
      %p298 = scmp.ne.s32.totalorder %s287, %s290
      %p299 = scmp.eq.s32.totalorder %s25, 1
      %p300 = por %p298, %p299
      %p301 = scmp.ne.s32.totalorder %s290, %s291
      %p302 = scmp.eq.s32.totalorder %s25, 0
      %p303 = por %p301, %p302
      %p304 = scmp.ne.s32.totalorder %s290, %s291
      %p305 = scmp.eq.s32.totalorder %s26, 1
      %p306 = por %p304, %p305
      %p308 = scmp.ne.s32.totalorder %s291, %s307
      %p309 = scmp.eq.s32.totalorder %s26, 0
      %p310 = por %p308, %p309
      %p311 = scmp.le.s32.totalorder 1, %s20
      %p312 = scmp.lt.s32.totalorder %s20, 3
      %p313 = pnand %p311, %p312
      %p314 = pneg %p313
      // Predicated region
      $region9: #{encoder_forward.1} parent=5 // pred_check
        _
      $region10: #{encoder_forward.1} parent=5 // pred_check_branch
        %316 = sbr.rel (%p313) target = $region12
      $region11: #{encoder_forward.1} parent=5 // pred_region
        %s317 = ssub.s32 %s20, 1
        // Predicated region
        $region13: #{encoder_forward.1} parent=11 // pred_check
          %p318 = pneg %p67
        $region14: #{encoder_forward.1} parent=11 // pred_check_branch
          %320 = sbr.rel (%p318) target = $region16
        $region15: #{encoder_forward.1} parent=11 // pred_region
          _
        $region16: #{encoder_forward.1} parent=11 // pred_fallthru
          _
        // Predicated region
        $region17: #{encoder_forward.1} parent=11 // pred_check
          %p321 = pneg %p88
        $region18: #{encoder_forward.1} parent=11 // pred_check_branch
          %323 = sbr.rel (%p321) target = $region20
        $region19: #{encoder_forward.1} parent=11 // pred_region
          _
        $region20: #{encoder_forward.1} parent=11 // pred_fallthru
          _
        // Predicated region
        $region21: #{encoder_forward.1} parent=11 // pred_check
          %p324 = pneg %p109
        $region22: #{encoder_forward.1} parent=11 // pred_check_branch
          %326 = sbr.rel (%p324) target = $region24
        $region23: #{encoder_forward.1} parent=11 // pred_region
          _
        $region24: #{encoder_forward.1} parent=11 // pred_fallthru
          _
        // Predicated region
        $region25: #{encoder_forward.1} parent=11 // pred_check
          %p327 = pneg %p130
        $region26: #{encoder_forward.1} parent=11 // pred_check_branch
          %329 = sbr.rel (%p327) target = $region28
        $region27: #{encoder_forward.1} parent=11 // pred_region
          _
        $region28: #{encoder_forward.1} parent=11 // pred_fallthru
          _
        // Predicated region
        $region29: #{encoder_forward.1} parent=11 // pred_check
          %p330 = pneg %p151
        $region30: #{encoder_forward.1} parent=11 // pred_check_branch
          %332 = sbr.rel (%p330) target = $region32
        $region31: #{encoder_forward.1} parent=11 // pred_region
          %334 = vsyncadd [#allocation3], 0
          %s335 = sshll.u32 %s5, 4
          %s336 = int_to_ptr.hbm [resolvable:$true] %s335
          %s337 = sshll.u32 [#allocation2], 4
          %s338 = int_to_ptr.vmem [resolvable:$true] %s337
          %343 = dma.hbm_to_vmem [thread:$0]  %s336, 12288, %s338, [#allocation3], 128, 128, 8
        $region32: #{encoder_forward.1} parent=11 // pred_fallthru
          _
        // Predicated region
        $region33: #{encoder_forward.1} parent=11 // pred_check
          %p344 = pneg %p172
        $region34: #{encoder_forward.1} parent=11 // pred_check_branch
          %346 = sbr.rel (%p344) target = $region36
        $region35: #{encoder_forward.1} parent=11 // pred_region
          _
        $region36: #{encoder_forward.1} parent=11 // pred_fallthru
          _
        // Predicated region
        $region37: #{encoder_forward.1} parent=11 // pred_check
          %p347 = pneg %p193
        $region38: #{encoder_forward.1} parent=11 // pred_check_branch
          %349 = sbr.rel (%p347) target = $region40
        $region39: #{encoder_forward.1} parent=11 // pred_region
          _
        $region40: #{encoder_forward.1} parent=11 // pred_fallthru
          _
        // Predicated region
        $region41: #{encoder_forward.1} parent=11 // pred_check
          %p350 = pneg %p214
        $region42: #{encoder_forward.1} parent=11 // pred_check_branch
          %352 = sbr.rel (%p350) target = $region44
        $region43: #{encoder_forward.1} parent=11 // pred_region
          %354 = vsyncadd [#allocation5], 0
          %s355 = sshll.u32 %s8, 4
          %s356 = int_to_ptr.hbm [resolvable:$true] %s355
          %s357 = sshll.u32 [#allocation4], 4
          %s358 = int_to_ptr.vmem [resolvable:$true] %s357
          %363 = dma.hbm_to_vmem [thread:$0]  %s356, 12288, %s358, [#allocation5], 128, 128, 8
        $region44: #{encoder_forward.1} parent=11 // pred_fallthru
          _
        // Predicated region
        $region45: #{encoder_forward.1} parent=11 // pred_check
          %p364 = pneg %p235
        $region46: #{encoder_forward.1} parent=11 // pred_check_branch
          %366 = sbr.rel (%p364) target = $region48
        $region47: #{encoder_forward.1} parent=11 // pred_region
          _
        $region48: #{encoder_forward.1} parent=11 // pred_fallthru
          _
        // Predicated region
        $region49: #{encoder_forward.1} parent=11 // pred_check
          %p367 = pneg %p256
        $region50: #{encoder_forward.1} parent=11 // pred_check_branch
          %369 = sbr.rel (%p367) target = $region52
        $region51: #{encoder_forward.1} parent=11 // pred_region
          %371 = vsyncadd [#allocation5], 0
          %s372 = sshll.u32 %s10, 4
          %s373 = int_to_ptr.hbm [resolvable:$true] %s372
          %s374 = sshll.u32 [#allocation6], 4
          %s375 = int_to_ptr.vmem [resolvable:$true] %s374
          %380 = dma.hbm_to_vmem [thread:$0]  %s373, 8192, %s375, [#allocation5], 64, 64, 4
        $region52: #{encoder_forward.1} parent=11 // pred_fallthru
          _
        // Predicated region
        $region53: #{encoder_forward.1} parent=11 // pred_check
          %p381 = pneg %p277
        $region54: #{encoder_forward.1} parent=11 // pred_check_branch
          %383 = sbr.rel (%p381) target = $region56
        $region55: #{encoder_forward.1} parent=11 // pred_region
          _
        $region56: #{encoder_forward.1} parent=11 // pred_fallthru
          _
      $region12: #{encoder_forward.1} parent=5 // pred_fallthru
        _
      %p384 = scmp.lt.s32.totalorder %s20, 2
      // Predicated region
      $region57: #{encoder_forward.1} parent=5 // pred_check
        %p385 = pneg %p384
      $region58: #{encoder_forward.1} parent=5 // pred_check_branch
        %387 = sbr.rel (%p385) target = $region60
      $region59: #{encoder_forward.1} parent=5 // pred_region
        // Predicated region
        $region61: #{encoder_forward.1} parent=59 // pred_check
          %p388 = pneg %p40
        $region62: #{encoder_forward.1} parent=59 // pred_check_branch
          %390 = sbr.rel (%p388) target = $region64
        $region63: #{encoder_forward.1} parent=59 // pred_region
          %p391 = scmp.lt.s32.totalorder %s20, 1
          %s392 = scalar_select %p391, %s20, 1
          %s393 = smul.addr %s392, 2
          %s394 = smul.addr %s393, 4
          %s395 = scalar_lea.vmem %s0, %s394
        $region64: #{encoder_forward.1} parent=59 // pred_fallthru
          _
      $region60: #{encoder_forward.1} parent=5 // pred_fallthru
        _
      %p396 = scmp.le.s32.totalorder 1, %s20
      %p397 = scmp.lt.s32.totalorder %s20, 3
      %p398 = pnand %p396, %p397
      %p399 = pneg %p398
      // Predicated region
      $region65: #{encoder_forward.1} parent=5 // pred_check
        _
      $region66: #{encoder_forward.1} parent=5 // pred_check_branch
        %401 = sbr.rel (%p398) target = $region68
      $region67: #{encoder_forward.1} parent=5 // pred_region
        %s402 = ssub.s32 %s20, 1
        // Predicated region
        $region69: #{encoder_forward.1} parent=67 // pred_check
          %p403 = pneg %p151
        $region70: #{encoder_forward.1} parent=67 // pred_check_branch
          %405 = sbr.rel (%p403) target = $region72
        $region71: #{encoder_forward.1} parent=67 // pred_region
          %407 = dma.done [#allocation3], 12288
        $region72: #{encoder_forward.1} parent=67 // pred_fallthru
          _
        // Predicated region
        $region73: #{encoder_forward.1} parent=67 // pred_check
          %p408 = pneg %p214
        $region74: #{encoder_forward.1} parent=67 // pred_check_branch
          %410 = sbr.rel (%p408) target = $region76
        $region75: #{encoder_forward.1} parent=67 // pred_region
          %412 = dma.done [#allocation5], 12288
        $region76: #{encoder_forward.1} parent=67 // pred_fallthru
          _
        // Predicated region
        $region77: #{encoder_forward.1} parent=67 // pred_check
          %p413 = pneg %p256
        $region78: #{encoder_forward.1} parent=67 // pred_check_branch
          %415 = sbr.rel (%p413) target = $region80
        $region79: #{encoder_forward.1} parent=67 // pred_region
          %417 = dma.done [#allocation5], 8192
        $region80: #{encoder_forward.1} parent=67 // pred_fallthru
          _
        %p418 = scmp.lt.s32.totalorder %s25, 1
        %s419 = scalar_select %p418, %s25, 1
        %s420 = smul.addr %s419, 2
        %s421 = smul.addr %s420, 4
        %s422 = scalar_lea.vmem %s0, %s421
        %p423 = pneg %p46
        %p424 = pneg %p43
        %p425 = pneg %p67
        %p426 = pneg %p64
        %p427 = pneg %p88
        %p428 = pneg %p85
        %p429 = pneg %p109
        %p430 = pneg %p106
        %p431 = pneg %p130
        %p432 = pneg %p127
        %p433 = pneg %p151
        %p434 = pneg %p148
        %p435 = pneg %p172
        %p436 = pneg %p169
        %p437 = pneg %p193
        %p438 = pneg %p190
        %p439 = pneg %p214
        %p440 = pneg %p211
        %p441 = pneg %p235
        %p442 = pneg %p232
        %p443 = pneg %p256
        %p444 = pneg %p253
        %p445 = pneg %p277
        %p446 = pneg %p274
        %p447 = pneg %p303
        %p448 = pneg %p300
        %p449 = scmp.lt.s32.totalorder %s25, 1
        %s450 = scalar_select %p449, %s25, 1
        %s451 = scalar_lea.vmem %s12, %s450
        %p452 = scmp.lt.s32.totalorder %s25, 1
        %s453 = scalar_select %p452, %s25, 1
        %s454 = smul.addr %s453, 2
        %s455 = smul.addr %s454, 4
        %s456 = scalar_lea.vmem %s0, %s455
        %p457 = scmp.lt.s32.totalorder %s25, 1
        %s458 = scalar_select %p457, %s25, 1
        %s459 = scalar_lea.vmem %s12, %s458
        %v461 = vld [vmem:[%s456] sm:$0xf]
        %v462 = vld [vmem:[%s456 + $0x4] sm:$0xf]
        %v463 = vld [vmem:[%s1] sm:$0xf]
        %v464 = vld [vmem:[%s1 + $0x4] sm:$0xf]
        %v465 = vld [vmem:[%s1 + $0x8] sm:$0xf]
        %v466 = vld [vmem:[%s1 + $0xc] sm:$0xf]
        %v467 = vld [vmem:[%s1 + $0x10] sm:$0xf]
        %v468 = vld [vmem:[%s1 + $0x14] sm:$0xf]
        %v475 = vunpack.c.l.b16 %v463
        %v476 = vunpack.c.l.b16 %v464
        %v477 = vunpack.c.l.b16 %v465
        %v478 = vunpack.c.l.b16 %v466
        %v479 = vunpack.c.l.b16 %v467
        %v480 = vunpack.c.l.b16 %v468
        %v481 = vpack.c.b16 %v476, %v475
        %v482 = vpack.c.b16 %v478, %v477
        %v483 = vpack.c.b16 %v480, %v479
        %v486 = vunpack.c.l.b16 %v461
        %v487 = vunpack.c.l.b16 %v462
        %v488 = vpack.c.b16 %v487, %v486
        %vm490 = vcmask 130048
        %v492 = vsel %vm490, %v481, 0
        %v495 = vsel %vm490, %v482, 0
        %v498 = vsel %vm490, %v483, 0
        %500 = vmatpush.bf16.msra.mxu0 0
        %501 = vmatpush.bf16.msra.mxu0 0
        %502 = vmatpush.bf16.msra.mxu0 0
        %503 = vmatpush.bf16.msra.mxu0 0
        %504 = vmatpush.bf16.msra.mxu0 0
        %505 = vmatpush.bf16.msra.mxu0 0
        %506 = vmatpush.bf16.msra.mxu0 0
        %507 = vmatpush.bf16.msra.mxu0 %v488
        %508 = vmatmul.bf16.gmra.mxu0 %v492
        %v509 = vpop.f32.mrf.mxu0
        %v510 = vadd.f32 0.0, %v509
        %v511 = vpop.f32.mrf.mxu0
        %v512 = vadd.f32 0.0, %v511
        %513 = vmatmul.bf16.gmra.mxu0 %v495
        %v514 = vpop.f32.mrf.mxu0
        %v515 = vadd.f32 0.0, %v514
        %v516 = vpop.f32.mrf.mxu0
        %v517 = vadd.f32 0.0, %v516
        %518 = vmatmul.bf16.gmra.mxu0 %v498
        %v519 = vpop.f32.mrf.mxu0
        %v520 = vadd.f32 0.0, %v519
        %v521 = vpop.f32.mrf.mxu0
        %v522 = vadd.f32 0.0, %v521
        %523 = vdwg.mxu0
        %v524 = vpack.c.bf16 %v512, %v510
        %v525 = vld [vmem:[%s2] sm:$0xff]
        %v526 = vld [vmem:[%s2 + $0x8] sm:$0xff]
        %v527 = vld [vmem:[%s2 + $0x10] sm:$0xff]
        %v528 = vld [vmem:[%s2 + $0x18] sm:$0xff]
        %v529 = vld [vmem:[%s2 + $0x20] sm:$0xff]
        %v530 = vld [vmem:[%s2 + $0x28] sm:$0xff]
        %v531 = vld [vmem:[%s2 + $0x30] sm:$0xff]
        %v532 = vld [vmem:[%s2 + $0x38] sm:$0xff]
        %v533 = vpack.c.bf16 %v517, %v515
        %s534 = scalar_lea.vmem %s2, 64
        %v535 = vld [vmem:[%s534] sm:$0xff]
        %v536 = vld [vmem:[%s534 + $0x8] sm:$0xff]
        %v537 = vld [vmem:[%s534 + $0x10] sm:$0xff]
        %v538 = vld [vmem:[%s534 + $0x18] sm:$0xff]
        %v539 = vld [vmem:[%s534 + $0x20] sm:$0xff]
        %v540 = vld [vmem:[%s534 + $0x28] sm:$0xff]
        %v541 = vld [vmem:[%s534 + $0x30] sm:$0xff]
        %v542 = vld [vmem:[%s534 + $0x38] sm:$0xff]
        %v551 = vunpack.c.l.b16 %v535
        %v552 = vunpack.c.h.b16 %v535
        %v553 = vunpack.c.l.b16 %v536
        %v554 = vunpack.c.h.b16 %v536
        %v555 = vunpack.c.l.b16 %v537
        %v556 = vunpack.c.h.b16 %v537
        %v557 = vunpack.c.l.b16 %v538
        %v558 = vunpack.c.h.b16 %v538
        %v559 = vunpack.c.l.b16 %v539
        %v560 = vunpack.c.h.b16 %v539
        %v561 = vunpack.c.l.b16 %v540
        %v562 = vunpack.c.h.b16 %v540
        %v563 = vunpack.c.l.b16 %v541
        %v564 = vunpack.c.h.b16 %v541
        %v565 = vunpack.c.l.b16 %v542
        %v566 = vunpack.c.h.b16 %v542
        %v567 = vpack.c.b16 %v553, %v551
        %v568 = vpack.c.b16 %v554, %v552
        %v569 = vpack.c.b16 %v557, %v555
        %v570 = vpack.c.b16 %v558, %v556
        %v571 = vpack.c.b16 %v561, %v559
        %v572 = vpack.c.b16 %v562, %v560
        %v573 = vpack.c.b16 %v565, %v563
        %v574 = vpack.c.b16 %v566, %v564
        %vm583 = vcmask 523264
        %v585 = vsel %vm583, %v533, 0
        %587 = vmatpush.bf16.msra.mxu0 0
        %588 = vmatpush.bf16.msra.mxu0 0
        %589 = vmatpush.bf16.msra.mxu0 0
        %590 = vmatpush.bf16.msra.mxu0 0
        %591 = vmatpush.bf16.msra.mxu0 %v573
        %592 = vmatpush.bf16.msra.mxu0 %v571
        %593 = vmatpush.bf16.msra.mxu0 %v569
        %594 = vmatpush.bf16.msra.mxu0 %v567
        %595 = vmatmul.bf16.gmra.mxu0 %v585
        %v596 = vpop.f32.mrf.mxu0
        %v597 = vadd.f32 0.0, %v596
        %v598 = vpop.f32.mrf.mxu0
        %v599 = vadd.f32 0.0, %v598
        %600 = vdwg.mxu0
        %601 = vmatpush.bf16.msra.mxu0 0
        %602 = vmatpush.bf16.msra.mxu0 0
        %603 = vmatpush.bf16.msra.mxu0 0
        %604 = vmatpush.bf16.msra.mxu0 0
        %605 = vmatpush.bf16.msra.mxu0 %v574
        %606 = vmatpush.bf16.msra.mxu0 %v572
        %607 = vmatpush.bf16.msra.mxu0 %v570
        %608 = vmatpush.bf16.msra.mxu0 %v568
        %609 = vmatmul.bf16.gmra.mxu0 %v585
        %v610 = vpop.f32.mrf.mxu0
        %v611 = vadd.f32 0.0, %v610
        %v612 = vpop.f32.mrf.mxu0
        %v613 = vadd.f32 0.0, %v612
        %614 = vdwg.mxu0
        %v623 = vunpack.c.l.b16 %v525
        %v624 = vunpack.c.h.b16 %v525
        %v625 = vunpack.c.l.b16 %v526
        %v626 = vunpack.c.h.b16 %v526
        %v627 = vunpack.c.l.b16 %v527
        %v628 = vunpack.c.h.b16 %v527
        %v629 = vunpack.c.l.b16 %v528
        %v630 = vunpack.c.h.b16 %v528
        %v631 = vunpack.c.l.b16 %v529
        %v632 = vunpack.c.h.b16 %v529
        %v633 = vunpack.c.l.b16 %v530
        %v634 = vunpack.c.h.b16 %v530
        %v635 = vunpack.c.l.b16 %v531
        %v636 = vunpack.c.h.b16 %v531
        %v637 = vunpack.c.l.b16 %v532
        %v638 = vunpack.c.h.b16 %v532
        %v639 = vpack.c.b16 %v625, %v623
        %v640 = vpack.c.b16 %v626, %v624
        %v641 = vpack.c.b16 %v629, %v627
        %v642 = vpack.c.b16 %v630, %v628
        %v643 = vpack.c.b16 %v633, %v631
        %v644 = vpack.c.b16 %v634, %v632
        %v645 = vpack.c.b16 %v637, %v635
        %v646 = vpack.c.b16 %v638, %v636
        %v656 = vsel %vm583, %v524, 0
        %658 = vmatpush.bf16.msra.mxu0 0
        %659 = vmatpush.bf16.msra.mxu0 0
        %660 = vmatpush.bf16.msra.mxu0 0
        %661 = vmatpush.bf16.msra.mxu0 0
        %662 = vmatpush.bf16.msra.mxu0 %v645
        %663 = vmatpush.bf16.msra.mxu0 %v643
        %664 = vmatpush.bf16.msra.mxu0 %v641
        %665 = vmatpush.bf16.msra.mxu0 %v639
        %666 = vmatmul.bf16.gmra.mxu0 %v656
        %v667 = vpop.f32.mrf.mxu0
        %v668 = vadd.f32 %v597, %v667
        %v669 = vpop.f32.mrf.mxu0
        %v670 = vadd.f32 %v599, %v669
        %671 = vdwg.mxu0
        %672 = vmatpush.bf16.msra.mxu0 0
        %673 = vmatpush.bf16.msra.mxu0 0
        %674 = vmatpush.bf16.msra.mxu0 0
        %675 = vmatpush.bf16.msra.mxu0 0
        %676 = vmatpush.bf16.msra.mxu0 %v646
        %677 = vmatpush.bf16.msra.mxu0 %v644
        %678 = vmatpush.bf16.msra.mxu0 %v642
        %679 = vmatpush.bf16.msra.mxu0 %v640
        %680 = vmatmul.bf16.gmra.mxu0 %v656
        %v681 = vpop.f32.mrf.mxu0
        %v682 = vadd.f32 %v611, %v681
        %v683 = vpop.f32.mrf.mxu0
        %v684 = vadd.f32 %v613, %v683
        %685 = vdwg.mxu0
        %v686 = vpack.c.bf16 %v522, %v520
        %s687 = scalar_lea.vmem %s2, 128
        %v688 = vld [vmem:[%s687] sm:$0xff]
        %v689 = vld [vmem:[%s687 + $0x8] sm:$0xff]
        %v690 = vld [vmem:[%s687 + $0x10] sm:$0xff]
        %v691 = vld [vmem:[%s687 + $0x18] sm:$0xff]
        %v692 = vld [vmem:[%s687 + $0x20] sm:$0xff]
        %v693 = vld [vmem:[%s687 + $0x28] sm:$0xff]
        %v694 = vld [vmem:[%s687 + $0x30] sm:$0xff]
        %v695 = vld [vmem:[%s687 + $0x38] sm:$0xff]
        %v704 = vunpack.c.l.b16 %v688
        %v705 = vunpack.c.h.b16 %v688
        %v706 = vunpack.c.l.b16 %v689
        %v707 = vunpack.c.h.b16 %v689
        %v708 = vunpack.c.l.b16 %v690
        %v709 = vunpack.c.h.b16 %v690
        %v710 = vunpack.c.l.b16 %v691
        %v711 = vunpack.c.h.b16 %v691
        %v712 = vunpack.c.l.b16 %v692
        %v713 = vunpack.c.h.b16 %v692
        %v714 = vunpack.c.l.b16 %v693
        %v715 = vunpack.c.h.b16 %v693
        %v716 = vunpack.c.l.b16 %v694
        %v717 = vunpack.c.h.b16 %v694
        %v718 = vunpack.c.l.b16 %v695
        %v719 = vunpack.c.h.b16 %v695
        %v720 = vpack.c.b16 %v706, %v704
        %v721 = vpack.c.b16 %v707, %v705
        %v722 = vpack.c.b16 %v710, %v708
        %v723 = vpack.c.b16 %v711, %v709
        %v724 = vpack.c.b16 %v714, %v712
        %v725 = vpack.c.b16 %v715, %v713
        %v726 = vpack.c.b16 %v718, %v716
        %v727 = vpack.c.b16 %v719, %v717
        %v737 = vsel %vm583, %v686, 0
        %739 = vmatpush.bf16.msra.mxu0 0
        %740 = vmatpush.bf16.msra.mxu0 0
        %741 = vmatpush.bf16.msra.mxu0 0
        %742 = vmatpush.bf16.msra.mxu0 0
        %743 = vmatpush.bf16.msra.mxu0 %v726
        %744 = vmatpush.bf16.msra.mxu0 %v724
        %745 = vmatpush.bf16.msra.mxu0 %v722
        %746 = vmatpush.bf16.msra.mxu0 %v720
        %747 = vmatmul.bf16.gmra.mxu0 %v737
        %v748 = vpop.f32.mrf.mxu0
        %v749 = vadd.f32 0.0, %v748
        %v750 = vpop.f32.mrf.mxu0
        %v751 = vadd.f32 0.0, %v750
        %752 = vdwg.mxu0
        %753 = vmatpush.bf16.msra.mxu0 0
        %754 = vmatpush.bf16.msra.mxu0 0
        %755 = vmatpush.bf16.msra.mxu0 0
        %756 = vmatpush.bf16.msra.mxu0 0
        %757 = vmatpush.bf16.msra.mxu0 %v727
        %758 = vmatpush.bf16.msra.mxu0 %v725
        %759 = vmatpush.bf16.msra.mxu0 %v723
        %760 = vmatpush.bf16.msra.mxu0 %v721
        %761 = vmatmul.bf16.gmra.mxu0 %v737
        %v762 = vpop.f32.mrf.mxu0
        %v763 = vadd.f32 0.0, %v762
        %v764 = vpop.f32.mrf.mxu0
        %v765 = vadd.f32 0.0, %v764
        %766 = vdwg.mxu0
        %v767 = vadd.f32 %v668, %v749
        %v768 = vadd.f32 %v682, %v763
        %v769 = vadd.f32 %v670, %v751
        %v770 = vadd.f32 %v684, %v765
        %v771 = vld [vmem:[%s3] sm:$0x3]
        %v773 = vperm.slane %v771, 0
        %v774 = vperm.slane %v771, 1
        %v777 = vadd.f32 %v767, %v773
        %v778 = vadd.f32 %v768, %v774
        %v779 = vadd.f32 %v769, %v773
        %v780 = vadd.f32 %v770, %v774
        %v781 = vmax.f32 %v777, 0.0
        %v782 = vmax.f32 %v778, 0.0
        %v783 = vmax.f32 %v779, 0.0
        %v784 = vmax.f32 %v780, 0.0
        %v785 = vld [vmem:[%s4] sm:$0xf]
        %v786 = vld [vmem:[%s4 + $0x4] sm:$0xf]
        %v787 = vld [vmem:[%s4 + $0x8] sm:$0xf]
        %v788 = vpack.c.bf16 %v783, %v781
        %v789 = vpack.c.bf16 %v784, %v782
        %v793 = vunpack.c.l.b16 %v785
        %v794 = vunpack.c.l.b16 %v786
        %v795 = vunpack.c.l.b16 %v787
        %v796 = vpack.c.b16 %v794, %v793
        %v797 = vpack.c.b16 %v795, %v795
        %v799 = vsel %vm490, %v796, 0
        %v802 = vsel %vm490, %v797, 0
        %804 = vmatpush.bf16.msra.mxu0 0
        %805 = vmatpush.bf16.msra.mxu0 0
        %806 = vmatpush.bf16.msra.mxu0 0
        %807 = vmatpush.bf16.msra.mxu0 0
        %808 = vmatpush.bf16.msra.mxu0 0
        %809 = vmatpush.bf16.msra.mxu0 0
        %810 = vmatpush.bf16.msra.mxu0 0
        %811 = vmatpush.bf16.msra.mxu0 %v788
        %812 = vmatmul.bf16.gmra.mxu0 %v799
        %v813 = vpop.f32.mrf.mxu0
        %v814 = vadd.f32 0.0, %v813
        %v815 = vpop.f32.mrf.mxu0
        %v816 = vadd.f32 0.0, %v815
        %817 = vmatmul.bf16.gmra.mxu0 %v802
        %v818 = vpop.f32.mrf.mxu0
        %v819 = vadd.f32 0.0, %v818
        %v820 = vpop.f32.mrf.mxu0
        %821 = vdwg.mxu0
        %822 = vmatpush.bf16.msra.mxu0 0
        %823 = vmatpush.bf16.msra.mxu0 0
        %824 = vmatpush.bf16.msra.mxu0 0
        %825 = vmatpush.bf16.msra.mxu0 0
        %826 = vmatpush.bf16.msra.mxu0 0
        %827 = vmatpush.bf16.msra.mxu0 0
        %828 = vmatpush.bf16.msra.mxu0 0
        %829 = vmatpush.bf16.msra.mxu0 %v789
        %830 = vmatmul.bf16.gmra.mxu0 %v799
        %v831 = vpop.f32.mrf.mxu0
        %v832 = vadd.f32 0.0, %v831
        %v833 = vpop.f32.mrf.mxu0
        %v834 = vadd.f32 0.0, %v833
        %835 = vmatmul.bf16.gmra.mxu0 %v802
        %v836 = vpop.f32.mrf.mxu0
        %v837 = vadd.f32 0.0, %v836
        %v838 = vpop.f32.mrf.mxu0
        %839 = vdwg.mxu0
        %v840 = vpack.c.bf16 %v814, %v814
        %v841 = vpack.c.bf16 %v832, %v832
        %v842 = vld [vmem:[#allocation2] sm:$0xff]
        %v843 = vld [vmem:[#allocation2 + $0x8] sm:$0xff]
        %v844 = vld [vmem:[#allocation2 + $0x10] sm:$0xff]
        %v845 = vld [vmem:[#allocation2 + $0x18] sm:$0xff]
        %v846 = vld [vmem:[#allocation2 + $0x20] sm:$0xff]
        %v847 = vld [vmem:[#allocation2 + $0x28] sm:$0xff]
        %v848 = vld [vmem:[#allocation2 + $0x30] sm:$0xff]
        %v849 = vld [vmem:[#allocation2 + $0x38] sm:$0xff]
        %v850 = vld [vmem:[#allocation2 + $0x40] sm:$0xff]
        %v851 = vld [vmem:[#allocation2 + $0x48] sm:$0xff]
        %v852 = vld [vmem:[#allocation2 + $0x50] sm:$0xff]
        %v853 = vld [vmem:[#allocation2 + $0x58] sm:$0xff]
        %v854 = vld [vmem:[#allocation2 + $0x60] sm:$0xff]
        %v855 = vld [vmem:[#allocation2 + $0x68] sm:$0xff]
        %v856 = vld [vmem:[#allocation2 + $0x70] sm:$0xff]
        %v857 = vld [vmem:[#allocation2 + $0x78] sm:$0xff]
        %v858 = vld [vmem:[#allocation2 + $0x80] sm:$0xff]
        %v859 = vld [vmem:[#allocation2 + $0x88] sm:$0xff]
        %v860 = vld [vmem:[#allocation2 + $0x90] sm:$0xff]
        %v861 = vld [vmem:[#allocation2 + $0x98] sm:$0xff]
        %v862 = vld [vmem:[#allocation2 + $0xa0] sm:$0xff]
        %v863 = vld [vmem:[#allocation2 + $0xa8] sm:$0xff]
        %v864 = vld [vmem:[#allocation2 + $0xb0] sm:$0xff]
        %v865 = vld [vmem:[#allocation2 + $0xb8] sm:$0xff]
        %v866 = vld [vmem:[#allocation2 + $0xc0] sm:$0xff]
        %v867 = vld [vmem:[#allocation2 + $0xc8] sm:$0xff]
        %v868 = vld [vmem:[#allocation2 + $0xd0] sm:$0xff]
        %v869 = vld [vmem:[#allocation2 + $0xd8] sm:$0xff]
        %v870 = vld [vmem:[#allocation2 + $0xe0] sm:$0xff]
        %v871 = vld [vmem:[#allocation2 + $0xe8] sm:$0xff]
        %v872 = vld [vmem:[#allocation2 + $0xf0] sm:$0xff]
        %v873 = vld [vmem:[#allocation2 + $0xf8] sm:$0xff]
        %v874 = vpack.c.bf16 %v816, %v816
        %v875 = vpack.c.bf16 %v834, %v834
        %s876 = scalar_lea.vmem [#allocation2], 256
        %v877 = vld [vmem:[%s876] sm:$0xff]
        %v878 = vld [vmem:[%s876 + $0x8] sm:$0xff]
        %v879 = vld [vmem:[%s876 + $0x10] sm:$0xff]
        %v880 = vld [vmem:[%s876 + $0x18] sm:$0xff]
        %v881 = vld [vmem:[%s876 + $0x20] sm:$0xff]
        %v882 = vld [vmem:[%s876 + $0x28] sm:$0xff]
        %v883 = vld [vmem:[%s876 + $0x30] sm:$0xff]
        %v884 = vld [vmem:[%s876 + $0x38] sm:$0xff]
        %v885 = vld [vmem:[%s876 + $0x40] sm:$0xff]
        %v886 = vld [vmem:[%s876 + $0x48] sm:$0xff]
        %v887 = vld [vmem:[%s876 + $0x50] sm:$0xff]
        %v888 = vld [vmem:[%s876 + $0x58] sm:$0xff]
        %v889 = vld [vmem:[%s876 + $0x60] sm:$0xff]
        %v890 = vld [vmem:[%s876 + $0x68] sm:$0xff]
        %v891 = vld [vmem:[%s876 + $0x70] sm:$0xff]
        %v892 = vld [vmem:[%s876 + $0x78] sm:$0xff]
        %v893 = vld [vmem:[%s876 + $0x80] sm:$0xff]
        %v894 = vld [vmem:[%s876 + $0x88] sm:$0xff]
        %v895 = vld [vmem:[%s876 + $0x90] sm:$0xff]
        %v896 = vld [vmem:[%s876 + $0x98] sm:$0xff]
        %v897 = vld [vmem:[%s876 + $0xa0] sm:$0xff]
        %v898 = vld [vmem:[%s876 + $0xa8] sm:$0xff]
        %v899 = vld [vmem:[%s876 + $0xb0] sm:$0xff]
        %v900 = vld [vmem:[%s876 + $0xb8] sm:$0xff]
        %v901 = vld [vmem:[%s876 + $0xc0] sm:$0xff]
        %v902 = vld [vmem:[%s876 + $0xc8] sm:$0xff]
        %v903 = vld [vmem:[%s876 + $0xd0] sm:$0xff]
        %v904 = vld [vmem:[%s876 + $0xd8] sm:$0xff]
        %v905 = vld [vmem:[%s876 + $0xe0] sm:$0xff]
        %v906 = vld [vmem:[%s876 + $0xe8] sm:$0xff]
        %v907 = vld [vmem:[%s876 + $0xf0] sm:$0xff]
        %v908 = vld [vmem:[%s876 + $0xf8] sm:$0xff]
        %v941 = vunpack.c.l.b16 %v877
        %v942 = vunpack.c.h.b16 %v877
        %v943 = vunpack.c.l.b16 %v878
        %v944 = vunpack.c.h.b16 %v878
        %v945 = vunpack.c.l.b16 %v879
        %v946 = vunpack.c.h.b16 %v879
        %v947 = vunpack.c.l.b16 %v880
        %v948 = vunpack.c.h.b16 %v880
        %v949 = vunpack.c.l.b16 %v881
        %v950 = vunpack.c.h.b16 %v881
        %v951 = vunpack.c.l.b16 %v882
        %v952 = vunpack.c.h.b16 %v882
        %v953 = vunpack.c.l.b16 %v883
        %v954 = vunpack.c.h.b16 %v883
        %v955 = vunpack.c.l.b16 %v884
        %v956 = vunpack.c.h.b16 %v884
        %v957 = vunpack.c.l.b16 %v885
        %v958 = vunpack.c.h.b16 %v885
        %v959 = vunpack.c.l.b16 %v886
        %v960 = vunpack.c.h.b16 %v886
        %v961 = vunpack.c.l.b16 %v887
        %v962 = vunpack.c.h.b16 %v887
        %v963 = vunpack.c.l.b16 %v888
        %v964 = vunpack.c.h.b16 %v888
        %v965 = vunpack.c.l.b16 %v889
        %v966 = vunpack.c.h.b16 %v889
        %v967 = vunpack.c.l.b16 %v890
        %v968 = vunpack.c.h.b16 %v890
        %v969 = vunpack.c.l.b16 %v891
        %v970 = vunpack.c.h.b16 %v891
        %v971 = vunpack.c.l.b16 %v892
        %v972 = vunpack.c.h.b16 %v892
        %v973 = vunpack.c.l.b16 %v893
        %v974 = vunpack.c.h.b16 %v893
        %v975 = vunpack.c.l.b16 %v894
        %v976 = vunpack.c.h.b16 %v894
        %v977 = vunpack.c.l.b16 %v895
        %v978 = vunpack.c.h.b16 %v895
        %v979 = vunpack.c.l.b16 %v896
        %v980 = vunpack.c.h.b16 %v896
        %v981 = vunpack.c.l.b16 %v897
        %v982 = vunpack.c.h.b16 %v897
        %v983 = vunpack.c.l.b16 %v898
        %v984 = vunpack.c.h.b16 %v898
        %v985 = vunpack.c.l.b16 %v899
        %v986 = vunpack.c.h.b16 %v899
        %v987 = vunpack.c.l.b16 %v900
        %v988 = vunpack.c.h.b16 %v900
        %v989 = vunpack.c.l.b16 %v901
        %v990 = vunpack.c.h.b16 %v901
        %v991 = vunpack.c.l.b16 %v902
        %v992 = vunpack.c.h.b16 %v902
        %v993 = vunpack.c.l.b16 %v903
        %v994 = vunpack.c.h.b16 %v903
        %v995 = vunpack.c.l.b16 %v904
        %v996 = vunpack.c.h.b16 %v904
        %v997 = vunpack.c.l.b16 %v905
        %v998 = vunpack.c.h.b16 %v905
        %v999 = vunpack.c.l.b16 %v906
        %v1000 = vunpack.c.h.b16 %v906
        %v1001 = vunpack.c.l.b16 %v907
        %v1002 = vunpack.c.h.b16 %v907
        %v1003 = vunpack.c.l.b16 %v908
        %v1004 = vunpack.c.h.b16 %v908
        %v1005 = vpack.c.b16 %v943, %v941
        %v1006 = vpack.c.b16 %v944, %v942
        %v1007 = vpack.c.b16 %v947, %v945
        %v1008 = vpack.c.b16 %v948, %v946
        %v1009 = vpack.c.b16 %v951, %v949
        %v1010 = vpack.c.b16 %v952, %v950
        %v1011 = vpack.c.b16 %v955, %v953
        %v1012 = vpack.c.b16 %v956, %v954
        %v1013 = vpack.c.b16 %v959, %v957
        %v1014 = vpack.c.b16 %v960, %v958
        %v1015 = vpack.c.b16 %v963, %v961
        %v1016 = vpack.c.b16 %v964, %v962
        %v1017 = vpack.c.b16 %v967, %v965
        %v1018 = vpack.c.b16 %v968, %v966
        %v1019 = vpack.c.b16 %v971, %v969
        %v1020 = vpack.c.b16 %v972, %v970
        %v1021 = vpack.c.b16 %v975, %v973
        %v1022 = vpack.c.b16 %v976, %v974
        %v1023 = vpack.c.b16 %v979, %v977
        %v1024 = vpack.c.b16 %v980, %v978
        %v1025 = vpack.c.b16 %v983, %v981
        %v1026 = vpack.c.b16 %v984, %v982
        %v1027 = vpack.c.b16 %v987, %v985
        %v1028 = vpack.c.b16 %v988, %v986
        %v1029 = vpack.c.b16 %v991, %v989
        %v1030 = vpack.c.b16 %v992, %v990
        %v1031 = vpack.c.b16 %v995, %v993
        %v1032 = vpack.c.b16 %v996, %v994
        %v1033 = vpack.c.b16 %v999, %v997
        %v1034 = vpack.c.b16 %v1000, %v998
        %v1035 = vpack.c.b16 %v1003, %v1001
        %v1036 = vpack.c.b16 %v1004, %v1002
        %1069 = vmatpush.bf16.msra.mxu0 %v1019
        %1070 = vmatpush.bf16.msra.mxu0 %v1017
        %1071 = vmatpush.bf16.msra.mxu0 %v1015
        %1072 = vmatpush.bf16.msra.mxu0 %v1013
        %1073 = vmatpush.bf16.msra.mxu0 %v1011
        %1074 = vmatpush.bf16.msra.mxu0 %v1009
        %1075 = vmatpush.bf16.msra.mxu0 %v1007
        %1076 = vmatpush.bf16.msra.mxu0 %v1005
        %1077 = vmatmul.bf16.gmra.mxu0 %v874
        %v1078 = vpop.f32.mrf.mxu0
        %v1079 = vadd.f32 0.0, %v1078
        %v1080 = vpop.f32.mrf.mxu0
        %1081 = vdwg.mxu0
        %1082 = vmatpush.bf16.msra.mxu0 %v1035
        %1083 = vmatpush.bf16.msra.mxu0 %v1033
        %1084 = vmatpush.bf16.msra.mxu0 %v1031
        %1085 = vmatpush.bf16.msra.mxu0 %v1029
        %1086 = vmatpush.bf16.msra.mxu0 %v1027
        %1087 = vmatpush.bf16.msra.mxu0 %v1025
        %1088 = vmatpush.bf16.msra.mxu0 %v1023
        %1089 = vmatpush.bf16.msra.mxu0 %v1021
        %1090 = vmatmul.bf16.gmra.mxu0 %v875
        %v1091 = vpop.f32.mrf.mxu0
        %v1092 = vadd.f32 %v1079, %v1091
        %v1093 = vpop.f32.mrf.mxu0
        %1094 = vdwg.mxu0
        %1095 = vmatpush.bf16.msra.mxu0 %v1020
        %1096 = vmatpush.bf16.msra.mxu0 %v1018
        %1097 = vmatpush.bf16.msra.mxu0 %v1016
        %1098 = vmatpush.bf16.msra.mxu0 %v1014
        %1099 = vmatpush.bf16.msra.mxu0 %v1012
        %1100 = vmatpush.bf16.msra.mxu0 %v1010
        %1101 = vmatpush.bf16.msra.mxu0 %v1008
        %1102 = vmatpush.bf16.msra.mxu0 %v1006
        %1103 = vmatmul.bf16.gmra.mxu0 %v874
        %v1104 = vpop.f32.mrf.mxu0
        %v1105 = vadd.f32 0.0, %v1104
        %v1106 = vpop.f32.mrf.mxu0
        %1107 = vdwg.mxu0
        %1108 = vmatpush.bf16.msra.mxu0 %v1036
        %1109 = vmatpush.bf16.msra.mxu0 %v1034
        %1110 = vmatpush.bf16.msra.mxu0 %v1032
        %1111 = vmatpush.bf16.msra.mxu0 %v1030
        %1112 = vmatpush.bf16.msra.mxu0 %v1028
        %1113 = vmatpush.bf16.msra.mxu0 %v1026
        %1114 = vmatpush.bf16.msra.mxu0 %v1024
        %1115 = vmatpush.bf16.msra.mxu0 %v1022
        %1116 = vmatmul.bf16.gmra.mxu0 %v875
        %v1117 = vpop.f32.mrf.mxu0
        %v1118 = vadd.f32 %v1105, %v1117
        %v1119 = vpop.f32.mrf.mxu0
        %1120 = vdwg.mxu0
        %v1153 = vunpack.c.l.b16 %v842
        %v1154 = vunpack.c.h.b16 %v842
        %v1155 = vunpack.c.l.b16 %v843
        %v1156 = vunpack.c.h.b16 %v843
        %v1157 = vunpack.c.l.b16 %v844
        %v1158 = vunpack.c.h.b16 %v844
        %v1159 = vunpack.c.l.b16 %v845
        %v1160 = vunpack.c.h.b16 %v845
        %v1161 = vunpack.c.l.b16 %v846
        %v1162 = vunpack.c.h.b16 %v846
        %v1163 = vunpack.c.l.b16 %v847
        %v1164 = vunpack.c.h.b16 %v847
        %v1165 = vunpack.c.l.b16 %v848
        %v1166 = vunpack.c.h.b16 %v848
        %v1167 = vunpack.c.l.b16 %v849
        %v1168 = vunpack.c.h.b16 %v849
        %v1169 = vunpack.c.l.b16 %v850
        %v1170 = vunpack.c.h.b16 %v850
        %v1171 = vunpack.c.l.b16 %v851
        %v1172 = vunpack.c.h.b16 %v851
        %v1173 = vunpack.c.l.b16 %v852
        %v1174 = vunpack.c.h.b16 %v852
        %v1175 = vunpack.c.l.b16 %v853
        %v1176 = vunpack.c.h.b16 %v853
        %v1177 = vunpack.c.l.b16 %v854
        %v1178 = vunpack.c.h.b16 %v854
        %v1179 = vunpack.c.l.b16 %v855
        %v1180 = vunpack.c.h.b16 %v855
        %v1181 = vunpack.c.l.b16 %v856
        %v1182 = vunpack.c.h.b16 %v856
        %v1183 = vunpack.c.l.b16 %v857
        %v1184 = vunpack.c.h.b16 %v857
        %v1185 = vunpack.c.l.b16 %v858
        %v1186 = vunpack.c.h.b16 %v858
        %v1187 = vunpack.c.l.b16 %v859
        %v1188 = vunpack.c.h.b16 %v859
        %v1189 = vunpack.c.l.b16 %v860
        %v1190 = vunpack.c.h.b16 %v860
        %v1191 = vunpack.c.l.b16 %v861
        %v1192 = vunpack.c.h.b16 %v861
        %v1193 = vunpack.c.l.b16 %v862
        %v1194 = vunpack.c.h.b16 %v862
        %v1195 = vunpack.c.l.b16 %v863
        %v1196 = vunpack.c.h.b16 %v863
        %v1197 = vunpack.c.l.b16 %v864
        %v1198 = vunpack.c.h.b16 %v864
        %v1199 = vunpack.c.l.b16 %v865
        %v1200 = vunpack.c.h.b16 %v865
        %v1201 = vunpack.c.l.b16 %v866
        %v1202 = vunpack.c.h.b16 %v866
        %v1203 = vunpack.c.l.b16 %v867
        %v1204 = vunpack.c.h.b16 %v867
        %v1205 = vunpack.c.l.b16 %v868
        %v1206 = vunpack.c.h.b16 %v868
        %v1207 = vunpack.c.l.b16 %v869
        %v1208 = vunpack.c.h.b16 %v869
        %v1209 = vunpack.c.l.b16 %v870
        %v1210 = vunpack.c.h.b16 %v870
        %v1211 = vunpack.c.l.b16 %v871
        %v1212 = vunpack.c.h.b16 %v871
        %v1213 = vunpack.c.l.b16 %v872
        %v1214 = vunpack.c.h.b16 %v872
        %v1215 = vunpack.c.l.b16 %v873
        %v1216 = vunpack.c.h.b16 %v873
        %v1217 = vpack.c.b16 %v1155, %v1153
        %v1218 = vpack.c.b16 %v1156, %v1154
        %v1219 = vpack.c.b16 %v1159, %v1157
        %v1220 = vpack.c.b16 %v1160, %v1158
        %v1221 = vpack.c.b16 %v1163, %v1161
        %v1222 = vpack.c.b16 %v1164, %v1162
        %v1223 = vpack.c.b16 %v1167, %v1165
        %v1224 = vpack.c.b16 %v1168, %v1166
        %v1225 = vpack.c.b16 %v1171, %v1169
        %v1226 = vpack.c.b16 %v1172, %v1170
        %v1227 = vpack.c.b16 %v1175, %v1173
        %v1228 = vpack.c.b16 %v1176, %v1174
        %v1229 = vpack.c.b16 %v1179, %v1177
        %v1230 = vpack.c.b16 %v1180, %v1178
        %v1231 = vpack.c.b16 %v1183, %v1181
        %v1232 = vpack.c.b16 %v1184, %v1182
        %v1233 = vpack.c.b16 %v1187, %v1185
        %v1234 = vpack.c.b16 %v1188, %v1186
        %v1235 = vpack.c.b16 %v1191, %v1189
        %v1236 = vpack.c.b16 %v1192, %v1190
        %v1237 = vpack.c.b16 %v1195, %v1193
        %v1238 = vpack.c.b16 %v1196, %v1194
        %v1239 = vpack.c.b16 %v1199, %v1197
        %v1240 = vpack.c.b16 %v1200, %v1198
        %v1241 = vpack.c.b16 %v1203, %v1201
        %v1242 = vpack.c.b16 %v1204, %v1202
        %v1243 = vpack.c.b16 %v1207, %v1205
        %v1244 = vpack.c.b16 %v1208, %v1206
        %v1245 = vpack.c.b16 %v1211, %v1209
        %v1246 = vpack.c.b16 %v1212, %v1210
        %v1247 = vpack.c.b16 %v1215, %v1213
        %v1248 = vpack.c.b16 %v1216, %v1214
        %1281 = vmatpush.bf16.msra.mxu0 %v1231
        %1282 = vmatpush.bf16.msra.mxu0 %v1229
        %1283 = vmatpush.bf16.msra.mxu0 %v1227
        %1284 = vmatpush.bf16.msra.mxu0 %v1225
        %1285 = vmatpush.bf16.msra.mxu0 %v1223
        %1286 = vmatpush.bf16.msra.mxu0 %v1221
        %1287 = vmatpush.bf16.msra.mxu0 %v1219
        %1288 = vmatpush.bf16.msra.mxu0 %v1217
        %1289 = vmatmul.bf16.gmra.mxu0 %v840
        %v1290 = vpop.f32.mrf.mxu0
        %v1291 = vadd.f32 %v1092, %v1290
        %v1292 = vpop.f32.mrf.mxu0
        %1293 = vdwg.mxu0
        %1294 = vmatpush.bf16.msra.mxu0 %v1247
        %1295 = vmatpush.bf16.msra.mxu0 %v1245
        %1296 = vmatpush.bf16.msra.mxu0 %v1243
        %1297 = vmatpush.bf16.msra.mxu0 %v1241
        %1298 = vmatpush.bf16.msra.mxu0 %v1239
        %1299 = vmatpush.bf16.msra.mxu0 %v1237
        %1300 = vmatpush.bf16.msra.mxu0 %v1235
        %1301 = vmatpush.bf16.msra.mxu0 %v1233
        %1302 = vmatmul.bf16.gmra.mxu0 %v841
        %v1303 = vpop.f32.mrf.mxu0
        %v1304 = vadd.f32 %v1291, %v1303
        %v1305 = vpop.f32.mrf.mxu0
        %1306 = vdwg.mxu0
        %1307 = vmatpush.bf16.msra.mxu0 %v1232
        %1308 = vmatpush.bf16.msra.mxu0 %v1230
        %1309 = vmatpush.bf16.msra.mxu0 %v1228
        %1310 = vmatpush.bf16.msra.mxu0 %v1226
        %1311 = vmatpush.bf16.msra.mxu0 %v1224
        %1312 = vmatpush.bf16.msra.mxu0 %v1222
        %1313 = vmatpush.bf16.msra.mxu0 %v1220
        %1314 = vmatpush.bf16.msra.mxu0 %v1218
        %1315 = vmatmul.bf16.gmra.mxu0 %v840
        %v1316 = vpop.f32.mrf.mxu0
        %v1317 = vadd.f32 %v1118, %v1316
        %v1318 = vpop.f32.mrf.mxu0
        %1319 = vdwg.mxu0
        %1320 = vmatpush.bf16.msra.mxu0 %v1248
        %1321 = vmatpush.bf16.msra.mxu0 %v1246
        %1322 = vmatpush.bf16.msra.mxu0 %v1244
        %1323 = vmatpush.bf16.msra.mxu0 %v1242
        %1324 = vmatpush.bf16.msra.mxu0 %v1240
        %1325 = vmatpush.bf16.msra.mxu0 %v1238
        %1326 = vmatpush.bf16.msra.mxu0 %v1236
        %1327 = vmatpush.bf16.msra.mxu0 %v1234
        %1328 = vmatmul.bf16.gmra.mxu0 %v841
        %v1329 = vpop.f32.mrf.mxu0
        %v1330 = vadd.f32 %v1317, %v1329
        %v1331 = vpop.f32.mrf.mxu0
        %1332 = vdwg.mxu0
        %v1333 = vpack.c.bf16 %v819, %v819
        %v1334 = vpack.c.bf16 %v837, %v837
        %s1335 = scalar_lea.vmem [#allocation2], 512
        %v1336 = vld [vmem:[%s1335] sm:$0xff]
        %v1337 = vld [vmem:[%s1335 + $0x8] sm:$0xff]
        %v1338 = vld [vmem:[%s1335 + $0x10] sm:$0xff]
        %v1339 = vld [vmem:[%s1335 + $0x18] sm:$0xff]
        %v1340 = vld [vmem:[%s1335 + $0x20] sm:$0xff]
        %v1341 = vld [vmem:[%s1335 + $0x28] sm:$0xff]
        %v1342 = vld [vmem:[%s1335 + $0x30] sm:$0xff]
        %v1343 = vld [vmem:[%s1335 + $0x38] sm:$0xff]
        %v1344 = vld [vmem:[%s1335 + $0x40] sm:$0xff]
        %v1345 = vld [vmem:[%s1335 + $0x48] sm:$0xff]
        %v1346 = vld [vmem:[%s1335 + $0x50] sm:$0xff]
        %v1347 = vld [vmem:[%s1335 + $0x58] sm:$0xff]
        %v1348 = vld [vmem:[%s1335 + $0x60] sm:$0xff]
        %v1349 = vld [vmem:[%s1335 + $0x68] sm:$0xff]
        %v1350 = vld [vmem:[%s1335 + $0x70] sm:$0xff]
        %v1351 = vld [vmem:[%s1335 + $0x78] sm:$0xff]
        %v1352 = vld [vmem:[%s1335 + $0x80] sm:$0xff]
        %v1353 = vld [vmem:[%s1335 + $0x88] sm:$0xff]
        %v1354 = vld [vmem:[%s1335 + $0x90] sm:$0xff]
        %v1355 = vld [vmem:[%s1335 + $0x98] sm:$0xff]
        %v1356 = vld [vmem:[%s1335 + $0xa0] sm:$0xff]
        %v1357 = vld [vmem:[%s1335 + $0xa8] sm:$0xff]
        %v1358 = vld [vmem:[%s1335 + $0xb0] sm:$0xff]
        %v1359 = vld [vmem:[%s1335 + $0xb8] sm:$0xff]
        %v1360 = vld [vmem:[%s1335 + $0xc0] sm:$0xff]
        %v1361 = vld [vmem:[%s1335 + $0xc8] sm:$0xff]
        %v1362 = vld [vmem:[%s1335 + $0xd0] sm:$0xff]
        %v1363 = vld [vmem:[%s1335 + $0xd8] sm:$0xff]
        %v1364 = vld [vmem:[%s1335 + $0xe0] sm:$0xff]
        %v1365 = vld [vmem:[%s1335 + $0xe8] sm:$0xff]
        %v1366 = vld [vmem:[%s1335 + $0xf0] sm:$0xff]
        %v1367 = vld [vmem:[%s1335 + $0xf8] sm:$0xff]
        %v1400 = vunpack.c.l.b16 %v1336
        %v1401 = vunpack.c.h.b16 %v1336
        %v1402 = vunpack.c.l.b16 %v1337
        %v1403 = vunpack.c.h.b16 %v1337
        %v1404 = vunpack.c.l.b16 %v1338
        %v1405 = vunpack.c.h.b16 %v1338
        %v1406 = vunpack.c.l.b16 %v1339
        %v1407 = vunpack.c.h.b16 %v1339
        %v1408 = vunpack.c.l.b16 %v1340
        %v1409 = vunpack.c.h.b16 %v1340
        %v1410 = vunpack.c.l.b16 %v1341
        %v1411 = vunpack.c.h.b16 %v1341
        %v1412 = vunpack.c.l.b16 %v1342
        %v1413 = vunpack.c.h.b16 %v1342
        %v1414 = vunpack.c.l.b16 %v1343
        %v1415 = vunpack.c.h.b16 %v1343
        %v1416 = vunpack.c.l.b16 %v1344
        %v1417 = vunpack.c.h.b16 %v1344
        %v1418 = vunpack.c.l.b16 %v1345
        %v1419 = vunpack.c.h.b16 %v1345
        %v1420 = vunpack.c.l.b16 %v1346
        %v1421 = vunpack.c.h.b16 %v1346
        %v1422 = vunpack.c.l.b16 %v1347
        %v1423 = vunpack.c.h.b16 %v1347
        %v1424 = vunpack.c.l.b16 %v1348
        %v1425 = vunpack.c.h.b16 %v1348
        %v1426 = vunpack.c.l.b16 %v1349
        %v1427 = vunpack.c.h.b16 %v1349
        %v1428 = vunpack.c.l.b16 %v1350
        %v1429 = vunpack.c.h.b16 %v1350
        %v1430 = vunpack.c.l.b16 %v1351
        %v1431 = vunpack.c.h.b16 %v1351
        %v1432 = vunpack.c.l.b16 %v1352
        %v1433 = vunpack.c.h.b16 %v1352
        %v1434 = vunpack.c.l.b16 %v1353
        %v1435 = vunpack.c.h.b16 %v1353
        %v1436 = vunpack.c.l.b16 %v1354
        %v1437 = vunpack.c.h.b16 %v1354
        %v1438 = vunpack.c.l.b16 %v1355
        %v1439 = vunpack.c.h.b16 %v1355
        %v1440 = vunpack.c.l.b16 %v1356
        %v1441 = vunpack.c.h.b16 %v1356
        %v1442 = vunpack.c.l.b16 %v1357
        %v1443 = vunpack.c.h.b16 %v1357
        %v1444 = vunpack.c.l.b16 %v1358
        %v1445 = vunpack.c.h.b16 %v1358
        %v1446 = vunpack.c.l.b16 %v1359
        %v1447 = vunpack.c.h.b16 %v1359
        %v1448 = vunpack.c.l.b16 %v1360
        %v1449 = vunpack.c.h.b16 %v1360
        %v1450 = vunpack.c.l.b16 %v1361
        %v1451 = vunpack.c.h.b16 %v1361
        %v1452 = vunpack.c.l.b16 %v1362
        %v1453 = vunpack.c.h.b16 %v1362
        %v1454 = vunpack.c.l.b16 %v1363
        %v1455 = vunpack.c.h.b16 %v1363
        %v1456 = vunpack.c.l.b16 %v1364
        %v1457 = vunpack.c.h.b16 %v1364
        %v1458 = vunpack.c.l.b16 %v1365
        %v1459 = vunpack.c.h.b16 %v1365
        %v1460 = vunpack.c.l.b16 %v1366
        %v1461 = vunpack.c.h.b16 %v1366
        %v1462 = vunpack.c.l.b16 %v1367
        %v1463 = vunpack.c.h.b16 %v1367
        %v1464 = vpack.c.b16 %v1402, %v1400
        %v1465 = vpack.c.b16 %v1403, %v1401
        %v1466 = vpack.c.b16 %v1406, %v1404
        %v1467 = vpack.c.b16 %v1407, %v1405
        %v1468 = vpack.c.b16 %v1410, %v1408
        %v1469 = vpack.c.b16 %v1411, %v1409
        %v1470 = vpack.c.b16 %v1414, %v1412
        %v1471 = vpack.c.b16 %v1415, %v1413
        %v1472 = vpack.c.b16 %v1418, %v1416
        %v1473 = vpack.c.b16 %v1419, %v1417
        %v1474 = vpack.c.b16 %v1422, %v1420
        %v1475 = vpack.c.b16 %v1423, %v1421
        %v1476 = vpack.c.b16 %v1426, %v1424
        %v1477 = vpack.c.b16 %v1427, %v1425
        %v1478 = vpack.c.b16 %v1430, %v1428
        %v1479 = vpack.c.b16 %v1431, %v1429
        %v1480 = vpack.c.b16 %v1434, %v1432
        %v1481 = vpack.c.b16 %v1435, %v1433
        %v1482 = vpack.c.b16 %v1438, %v1436
        %v1483 = vpack.c.b16 %v1439, %v1437
        %v1484 = vpack.c.b16 %v1442, %v1440
        %v1485 = vpack.c.b16 %v1443, %v1441
        %v1486 = vpack.c.b16 %v1446, %v1444
        %v1487 = vpack.c.b16 %v1447, %v1445
        %v1488 = vpack.c.b16 %v1450, %v1448
        %v1489 = vpack.c.b16 %v1451, %v1449
        %v1490 = vpack.c.b16 %v1454, %v1452
        %v1491 = vpack.c.b16 %v1455, %v1453
        %v1492 = vpack.c.b16 %v1458, %v1456
        %v1493 = vpack.c.b16 %v1459, %v1457
        %v1494 = vpack.c.b16 %v1462, %v1460
        %v1495 = vpack.c.b16 %v1463, %v1461
        %1528 = vmatpush.bf16.msra.mxu0 %v1478
        %1529 = vmatpush.bf16.msra.mxu0 %v1476
        %1530 = vmatpush.bf16.msra.mxu0 %v1474
        %1531 = vmatpush.bf16.msra.mxu0 %v1472
        %1532 = vmatpush.bf16.msra.mxu0 %v1470
        %1533 = vmatpush.bf16.msra.mxu0 %v1468
        %1534 = vmatpush.bf16.msra.mxu0 %v1466
        %1535 = vmatpush.bf16.msra.mxu0 %v1464
        %1536 = vmatmul.bf16.gmra.mxu0 %v1333
        %v1537 = vpop.f32.mrf.mxu0
        %v1538 = vadd.f32 0.0, %v1537
        %v1539 = vpop.f32.mrf.mxu0
        %1540 = vdwg.mxu0
        %1541 = vmatpush.bf16.msra.mxu0 %v1494
        %1542 = vmatpush.bf16.msra.mxu0 %v1492
        %1543 = vmatpush.bf16.msra.mxu0 %v1490
        %1544 = vmatpush.bf16.msra.mxu0 %v1488
        %1545 = vmatpush.bf16.msra.mxu0 %v1486
        %1546 = vmatpush.bf16.msra.mxu0 %v1484
        %1547 = vmatpush.bf16.msra.mxu0 %v1482
        %1548 = vmatpush.bf16.msra.mxu0 %v1480
        %1549 = vmatmul.bf16.gmra.mxu0 %v1334
        %v1550 = vpop.f32.mrf.mxu0
        %v1551 = vadd.f32 %v1538, %v1550
        %v1552 = vpop.f32.mrf.mxu0
        %1553 = vdwg.mxu0
        %1554 = vmatpush.bf16.msra.mxu0 %v1479
        %1555 = vmatpush.bf16.msra.mxu0 %v1477
        %1556 = vmatpush.bf16.msra.mxu0 %v1475
        %1557 = vmatpush.bf16.msra.mxu0 %v1473
        %1558 = vmatpush.bf16.msra.mxu0 %v1471
        %1559 = vmatpush.bf16.msra.mxu0 %v1469
        %1560 = vmatpush.bf16.msra.mxu0 %v1467
        %1561 = vmatpush.bf16.msra.mxu0 %v1465
        %1562 = vmatmul.bf16.gmra.mxu0 %v1333
        %v1563 = vpop.f32.mrf.mxu0
        %v1564 = vadd.f32 0.0, %v1563
        %v1565 = vpop.f32.mrf.mxu0
        %1566 = vdwg.mxu0
        %1567 = vmatpush.bf16.msra.mxu0 %v1495
        %1568 = vmatpush.bf16.msra.mxu0 %v1493
        %1569 = vmatpush.bf16.msra.mxu0 %v1491
        %1570 = vmatpush.bf16.msra.mxu0 %v1489
        %1571 = vmatpush.bf16.msra.mxu0 %v1487
        %1572 = vmatpush.bf16.msra.mxu0 %v1485
        %1573 = vmatpush.bf16.msra.mxu0 %v1483
        %1574 = vmatpush.bf16.msra.mxu0 %v1481
        %1575 = vmatmul.bf16.gmra.mxu0 %v1334
        %v1576 = vpop.f32.mrf.mxu0
        %v1577 = vadd.f32 %v1564, %v1576
        %v1578 = vpop.f32.mrf.mxu0
        %1579 = vdwg.mxu0
        %v1580 = vadd.f32 %v1304, %v1551
        %v1581 = vadd.f32 %v1330, %v1577
        %v1582 = vld [vmem:[%s6] sm:$0x3]
        %v1584 = vperm.slane %v1582, 0
        %v1585 = vperm.slane %v1582, 1
        %v1588 = vadd.f32 %v1580, %v1584
        %v1589 = vadd.f32 %v1581, %v1585
        %v1590 = vmax.f32 %v1588, 0.0
        %v1591 = vmax.f32 %v1589, 0.0
        %v1592 = vld [vmem:[%s7] sm:$0xf]
        %v1593 = vld [vmem:[%s7 + $0x4] sm:$0x3]
        %v1594 = vpack.c.bf16 %v1590, %v1590
        %v1595 = vpack.c.bf16 %v1591, %v1591
        %v1598 = vunpack.c.l.b16 %v1592
        %v1599 = vunpack.c.l.b16 %v1593
        %v1600 = vpack.c.b16 %v1599, %v1598
        %vm1601 = vcmask 64512
        %v1603 = vsel %vm1601, %v1600, 0
        %vm1605 = vcmask 1043456
        %v1607 = vsel %vm1605, %v1594, 0
        %v1610 = vsel %vm1605, %v1595, 0
        %1612 = vmatpush.bf16.msra.mxu0 0
        %1613 = vmatpush.bf16.msra.mxu0 0
        %1614 = vmatpush.bf16.msra.mxu0 0
        %1615 = vmatpush.bf16.msra.mxu0 0
        %1616 = vmatpush.bf16.msra.mxu0 0
        %1617 = vmatpush.bf16.msra.mxu0 0
        %1618 = vmatpush.bf16.msra.mxu0 0
        %1619 = vmatpush.bf16.msra.mxu0 %v1607
        %1620 = vmatmul.bf16.gmra.mxu0 %v1603
        %v1621 = vpop.f32.mrf.mxu0
        %v1622 = vadd.f32 0.0, %v1621
        %v1623 = vpop.f32.mrf.mxu0
        %v1624 = vadd.f32 0.0, %v1623
        %1625 = vdwg.mxu0
        %1626 = vmatpush.bf16.msra.mxu0 0
        %1627 = vmatpush.bf16.msra.mxu0 0
        %1628 = vmatpush.bf16.msra.mxu0 0
        %1629 = vmatpush.bf16.msra.mxu0 0
        %1630 = vmatpush.bf16.msra.mxu0 0
        %1631 = vmatpush.bf16.msra.mxu0 0
        %1632 = vmatpush.bf16.msra.mxu0 0
        %1633 = vmatpush.bf16.msra.mxu0 %v1610
        %1634 = vmatmul.bf16.gmra.mxu0 %v1603
        %v1635 = vpop.f32.mrf.mxu0
        %v1636 = vadd.f32 0.0, %v1635
        %v1637 = vpop.f32.mrf.mxu0
        %v1638 = vadd.f32 0.0, %v1637
        %1639 = vdwg.mxu0
        %v1640 = vpack.c.bf16 %v1622, %v1622
        %v1641 = vpack.c.bf16 %v1636, %v1636
        %v1642 = vld [vmem:[#allocation4] sm:$0xff]
        %v1643 = vld [vmem:[#allocation4 + $0x8] sm:$0xff]
        %v1644 = vld [vmem:[#allocation4 + $0x10] sm:$0xff]
        %v1645 = vld [vmem:[#allocation4 + $0x18] sm:$0xff]
        %v1646 = vld [vmem:[#allocation4 + $0x20] sm:$0xff]
        %v1647 = vld [vmem:[#allocation4 + $0x28] sm:$0xff]
        %v1648 = vld [vmem:[#allocation4 + $0x30] sm:$0xff]
        %v1649 = vld [vmem:[#allocation4 + $0x38] sm:$0xff]
        %v1650 = vld [vmem:[#allocation4 + $0x40] sm:$0xff]
        %v1651 = vld [vmem:[#allocation4 + $0x48] sm:$0xff]
        %v1652 = vld [vmem:[#allocation4 + $0x50] sm:$0xff]
        %v1653 = vld [vmem:[#allocation4 + $0x58] sm:$0xff]
        %v1654 = vld [vmem:[#allocation4 + $0x60] sm:$0xff]
        %v1655 = vld [vmem:[#allocation4 + $0x68] sm:$0xff]
        %v1656 = vld [vmem:[#allocation4 + $0x70] sm:$0xff]
        %v1657 = vld [vmem:[#allocation4 + $0x78] sm:$0xff]
        %v1658 = vld [vmem:[#allocation4 + $0x80] sm:$0xff]
        %v1659 = vld [vmem:[#allocation4 + $0x88] sm:$0xff]
        %v1660 = vld [vmem:[#allocation4 + $0x90] sm:$0xff]
        %v1661 = vld [vmem:[#allocation4 + $0x98] sm:$0xff]
        %v1662 = vld [vmem:[#allocation4 + $0xa0] sm:$0xff]
        %v1663 = vld [vmem:[#allocation4 + $0xa8] sm:$0xff]
        %v1664 = vld [vmem:[#allocation4 + $0xb0] sm:$0xff]
        %v1665 = vld [vmem:[#allocation4 + $0xb8] sm:$0xff]
        %v1666 = vld [vmem:[#allocation4 + $0xc0] sm:$0xff]
        %v1667 = vld [vmem:[#allocation4 + $0xc8] sm:$0xff]
        %v1668 = vld [vmem:[#allocation4 + $0xd0] sm:$0xff]
        %v1669 = vld [vmem:[#allocation4 + $0xd8] sm:$0xff]
        %v1670 = vld [vmem:[#allocation4 + $0xe0] sm:$0xff]
        %v1671 = vld [vmem:[#allocation4 + $0xe8] sm:$0xff]
        %v1672 = vld [vmem:[#allocation4 + $0xf0] sm:$0xff]
        %v1673 = vld [vmem:[#allocation4 + $0xf8] sm:$0xff]
        %s1674 = scalar_lea.vmem [#allocation4], 256
        %v1675 = vld [vmem:[%s1674] sm:$0xff]
        %v1676 = vld [vmem:[%s1674 + $0x8] sm:$0xff]
        %v1677 = vld [vmem:[%s1674 + $0x10] sm:$0xff]
        %v1678 = vld [vmem:[%s1674 + $0x18] sm:$0xff]
        %v1679 = vld [vmem:[%s1674 + $0x20] sm:$0xff]
        %v1680 = vld [vmem:[%s1674 + $0x28] sm:$0xff]
        %v1681 = vld [vmem:[%s1674 + $0x30] sm:$0xff]
        %v1682 = vld [vmem:[%s1674 + $0x38] sm:$0xff]
        %v1683 = vld [vmem:[%s1674 + $0x40] sm:$0xff]
        %v1684 = vld [vmem:[%s1674 + $0x48] sm:$0xff]
        %v1685 = vld [vmem:[%s1674 + $0x50] sm:$0xff]
        %v1686 = vld [vmem:[%s1674 + $0x58] sm:$0xff]
        %v1687 = vld [vmem:[%s1674 + $0x60] sm:$0xff]
        %v1688 = vld [vmem:[%s1674 + $0x68] sm:$0xff]
        %v1689 = vld [vmem:[%s1674 + $0x70] sm:$0xff]
        %v1690 = vld [vmem:[%s1674 + $0x78] sm:$0xff]
        %v1691 = vld [vmem:[%s1674 + $0x80] sm:$0xff]
        %v1692 = vld [vmem:[%s1674 + $0x88] sm:$0xff]
        %v1693 = vld [vmem:[%s1674 + $0x90] sm:$0xff]
        %v1694 = vld [vmem:[%s1674 + $0x98] sm:$0xff]
        %v1695 = vld [vmem:[%s1674 + $0xa0] sm:$0xff]
        %v1696 = vld [vmem:[%s1674 + $0xa8] sm:$0xff]
        %v1697 = vld [vmem:[%s1674 + $0xb0] sm:$0xff]
        %v1698 = vld [vmem:[%s1674 + $0xb8] sm:$0xff]
        %v1699 = vld [vmem:[%s1674 + $0xc0] sm:$0xff]
        %v1700 = vld [vmem:[%s1674 + $0xc8] sm:$0xff]
        %v1701 = vld [vmem:[%s1674 + $0xd0] sm:$0xff]
        %v1702 = vld [vmem:[%s1674 + $0xd8] sm:$0xff]
        %v1703 = vld [vmem:[%s1674 + $0xe0] sm:$0xff]
        %v1704 = vld [vmem:[%s1674 + $0xe8] sm:$0xff]
        %v1705 = vld [vmem:[%s1674 + $0xf0] sm:$0xff]
        %v1706 = vld [vmem:[%s1674 + $0xf8] sm:$0xff]
        %v1709 = vrot.slane %v1640, 2
        %v1710 = vrot.slane %v1641, 2
        %v1745 = vunpack.c.l.b16 %v1675
        %v1746 = vunpack.c.h.b16 %v1675
        %v1747 = vunpack.c.l.b16 %v1676
        %v1748 = vunpack.c.h.b16 %v1676
        %v1749 = vunpack.c.l.b16 %v1677
        %v1750 = vunpack.c.h.b16 %v1677
        %v1751 = vunpack.c.l.b16 %v1678
        %v1752 = vunpack.c.h.b16 %v1678
        %v1753 = vunpack.c.l.b16 %v1679
        %v1754 = vunpack.c.h.b16 %v1679
        %v1755 = vunpack.c.l.b16 %v1680
        %v1756 = vunpack.c.h.b16 %v1680
        %v1757 = vunpack.c.l.b16 %v1681
        %v1758 = vunpack.c.h.b16 %v1681
        %v1759 = vunpack.c.l.b16 %v1682
        %v1760 = vunpack.c.h.b16 %v1682
        %v1761 = vunpack.c.l.b16 %v1683
        %v1762 = vunpack.c.h.b16 %v1683
        %v1763 = vunpack.c.l.b16 %v1684
        %v1764 = vunpack.c.h.b16 %v1684
        %v1765 = vunpack.c.l.b16 %v1685
        %v1766 = vunpack.c.h.b16 %v1685
        %v1767 = vunpack.c.l.b16 %v1686
        %v1768 = vunpack.c.h.b16 %v1686
        %v1769 = vunpack.c.l.b16 %v1687
        %v1770 = vunpack.c.h.b16 %v1687
        %v1771 = vunpack.c.l.b16 %v1688
        %v1772 = vunpack.c.h.b16 %v1688
        %v1773 = vunpack.c.l.b16 %v1689
        %v1774 = vunpack.c.h.b16 %v1689
        %v1775 = vunpack.c.l.b16 %v1690
        %v1776 = vunpack.c.h.b16 %v1690
        %v1777 = vunpack.c.l.b16 %v1691
        %v1778 = vunpack.c.h.b16 %v1691
        %v1779 = vunpack.c.l.b16 %v1692
        %v1780 = vunpack.c.h.b16 %v1692
        %v1781 = vunpack.c.l.b16 %v1693
        %v1782 = vunpack.c.h.b16 %v1693
        %v1783 = vunpack.c.l.b16 %v1694
        %v1784 = vunpack.c.h.b16 %v1694
        %v1785 = vunpack.c.l.b16 %v1695
        %v1786 = vunpack.c.h.b16 %v1695
        %v1787 = vunpack.c.l.b16 %v1696
        %v1788 = vunpack.c.h.b16 %v1696
        %v1789 = vunpack.c.l.b16 %v1697
        %v1790 = vunpack.c.h.b16 %v1697
        %v1791 = vunpack.c.l.b16 %v1698
        %v1792 = vunpack.c.h.b16 %v1698
        %v1793 = vunpack.c.l.b16 %v1699
        %v1794 = vunpack.c.h.b16 %v1699
        %v1795 = vunpack.c.l.b16 %v1700
        %v1796 = vunpack.c.h.b16 %v1700
        %v1797 = vunpack.c.l.b16 %v1701
        %v1798 = vunpack.c.h.b16 %v1701
        %v1799 = vunpack.c.l.b16 %v1702
        %v1800 = vunpack.c.h.b16 %v1702
        %v1801 = vunpack.c.l.b16 %v1703
        %v1802 = vunpack.c.h.b16 %v1703
        %v1803 = vunpack.c.l.b16 %v1704
        %v1804 = vunpack.c.h.b16 %v1704
        %v1805 = vunpack.c.l.b16 %v1705
        %v1806 = vunpack.c.h.b16 %v1705
        %v1807 = vunpack.c.l.b16 %v1706
        %v1808 = vunpack.c.h.b16 %v1706
        %v1809 = vpack.c.b16 %v1747, %v1745
        %v1810 = vpack.c.b16 %v1748, %v1746
        %v1811 = vpack.c.b16 %v1751, %v1749
        %v1812 = vpack.c.b16 %v1752, %v1750
        %v1813 = vpack.c.b16 %v1755, %v1753
        %v1814 = vpack.c.b16 %v1756, %v1754
        %v1815 = vpack.c.b16 %v1759, %v1757
        %v1816 = vpack.c.b16 %v1760, %v1758
        %v1817 = vpack.c.b16 %v1763, %v1761
        %v1818 = vpack.c.b16 %v1764, %v1762
        %v1819 = vpack.c.b16 %v1767, %v1765
        %v1820 = vpack.c.b16 %v1768, %v1766
        %v1821 = vpack.c.b16 %v1771, %v1769
        %v1822 = vpack.c.b16 %v1772, %v1770
        %v1823 = vpack.c.b16 %v1775, %v1773
        %v1824 = vpack.c.b16 %v1776, %v1774
        %v1825 = vpack.c.b16 %v1779, %v1777
        %v1826 = vpack.c.b16 %v1780, %v1778
        %v1827 = vpack.c.b16 %v1783, %v1781
        %v1828 = vpack.c.b16 %v1784, %v1782
        %v1829 = vpack.c.b16 %v1787, %v1785
        %v1830 = vpack.c.b16 %v1788, %v1786
        %v1831 = vpack.c.b16 %v1791, %v1789
        %v1832 = vpack.c.b16 %v1792, %v1790
        %v1833 = vpack.c.b16 %v1795, %v1793
        %v1834 = vpack.c.b16 %v1796, %v1794
        %v1835 = vpack.c.b16 %v1799, %v1797
        %v1836 = vpack.c.b16 %v1800, %v1798
        %v1837 = vpack.c.b16 %v1803, %v1801
        %v1838 = vpack.c.b16 %v1804, %v1802
        %v1839 = vpack.c.b16 %v1807, %v1805
        %v1840 = vpack.c.b16 %v1808, %v1806
        %1873 = vmatpush.bf16.msra.mxu0 %v1823
        %1874 = vmatpush.bf16.msra.mxu0 %v1821
        %1875 = vmatpush.bf16.msra.mxu0 %v1819
        %1876 = vmatpush.bf16.msra.mxu0 %v1817
        %1877 = vmatpush.bf16.msra.mxu0 %v1815
        %1878 = vmatpush.bf16.msra.mxu0 %v1813
        %1879 = vmatpush.bf16.msra.mxu0 %v1811
        %1880 = vmatpush.bf16.msra.mxu0 %v1809
        %1881 = vmatmul.bf16.gmra.mxu0 %v1709
        %v1882 = vpop.f32.mrf.mxu0
        %v1883 = vadd.f32 0.0, %v1882
        %v1884 = vpop.f32.mrf.mxu0
        %1885 = vdwg.mxu0
        %1886 = vmatpush.bf16.msra.mxu0 %v1839
        %1887 = vmatpush.bf16.msra.mxu0 %v1837
        %1888 = vmatpush.bf16.msra.mxu0 %v1835
        %1889 = vmatpush.bf16.msra.mxu0 %v1833
        %1890 = vmatpush.bf16.msra.mxu0 %v1831
        %1891 = vmatpush.bf16.msra.mxu0 %v1829
        %1892 = vmatpush.bf16.msra.mxu0 %v1827
        %1893 = vmatpush.bf16.msra.mxu0 %v1825
        %1894 = vmatmul.bf16.gmra.mxu0 %v1710
        %v1895 = vpop.f32.mrf.mxu0
        %v1896 = vadd.f32 %v1883, %v1895
        %v1897 = vpop.f32.mrf.mxu0
        %1898 = vdwg.mxu0
        %1899 = vmatpush.bf16.msra.mxu0 %v1824
        %1900 = vmatpush.bf16.msra.mxu0 %v1822
        %1901 = vmatpush.bf16.msra.mxu0 %v1820
        %1902 = vmatpush.bf16.msra.mxu0 %v1818
        %1903 = vmatpush.bf16.msra.mxu0 %v1816
        %1904 = vmatpush.bf16.msra.mxu0 %v1814
        %1905 = vmatpush.bf16.msra.mxu0 %v1812
        %1906 = vmatpush.bf16.msra.mxu0 %v1810
        %1907 = vmatmul.bf16.gmra.mxu0 %v1709
        %v1908 = vpop.f32.mrf.mxu0
        %v1909 = vadd.f32 0.0, %v1908
        %v1910 = vpop.f32.mrf.mxu0
        %1911 = vdwg.mxu0
        %1912 = vmatpush.bf16.msra.mxu0 %v1840
        %1913 = vmatpush.bf16.msra.mxu0 %v1838
        %1914 = vmatpush.bf16.msra.mxu0 %v1836
        %1915 = vmatpush.bf16.msra.mxu0 %v1834
        %1916 = vmatpush.bf16.msra.mxu0 %v1832
        %1917 = vmatpush.bf16.msra.mxu0 %v1830
        %1918 = vmatpush.bf16.msra.mxu0 %v1828
        %1919 = vmatpush.bf16.msra.mxu0 %v1826
        %1920 = vmatmul.bf16.gmra.mxu0 %v1710
        %v1921 = vpop.f32.mrf.mxu0
        %v1922 = vadd.f32 %v1909, %v1921
        %v1923 = vpop.f32.mrf.mxu0
        %1924 = vdwg.mxu0
        %v1957 = vunpack.c.l.b16 %v1642
        %v1958 = vunpack.c.h.b16 %v1642
        %v1959 = vunpack.c.l.b16 %v1643
        %v1960 = vunpack.c.h.b16 %v1643
        %v1961 = vunpack.c.l.b16 %v1644
        %v1962 = vunpack.c.h.b16 %v1644
        %v1963 = vunpack.c.l.b16 %v1645
        %v1964 = vunpack.c.h.b16 %v1645
        %v1965 = vunpack.c.l.b16 %v1646
        %v1966 = vunpack.c.h.b16 %v1646
        %v1967 = vunpack.c.l.b16 %v1647
        %v1968 = vunpack.c.h.b16 %v1647
        %v1969 = vunpack.c.l.b16 %v1648
        %v1970 = vunpack.c.h.b16 %v1648
        %v1971 = vunpack.c.l.b16 %v1649
        %v1972 = vunpack.c.h.b16 %v1649
        %v1973 = vunpack.c.l.b16 %v1650
        %v1974 = vunpack.c.h.b16 %v1650
        %v1975 = vunpack.c.l.b16 %v1651
        %v1976 = vunpack.c.h.b16 %v1651
        %v1977 = vunpack.c.l.b16 %v1652
        %v1978 = vunpack.c.h.b16 %v1652
        %v1979 = vunpack.c.l.b16 %v1653
        %v1980 = vunpack.c.h.b16 %v1653
        %v1981 = vunpack.c.l.b16 %v1654
        %v1982 = vunpack.c.h.b16 %v1654
        %v1983 = vunpack.c.l.b16 %v1655
        %v1984 = vunpack.c.h.b16 %v1655
        %v1985 = vunpack.c.l.b16 %v1656
        %v1986 = vunpack.c.h.b16 %v1656
        %v1987 = vunpack.c.l.b16 %v1657
        %v1988 = vunpack.c.h.b16 %v1657
        %v1989 = vunpack.c.l.b16 %v1658
        %v1990 = vunpack.c.h.b16 %v1658
        %v1991 = vunpack.c.l.b16 %v1659
        %v1992 = vunpack.c.h.b16 %v1659
        %v1993 = vunpack.c.l.b16 %v1660
        %v1994 = vunpack.c.h.b16 %v1660
        %v1995 = vunpack.c.l.b16 %v1661
        %v1996 = vunpack.c.h.b16 %v1661
        %v1997 = vunpack.c.l.b16 %v1662
        %v1998 = vunpack.c.h.b16 %v1662
        %v1999 = vunpack.c.l.b16 %v1663
        %v2000 = vunpack.c.h.b16 %v1663
        %v2001 = vunpack.c.l.b16 %v1664
        %v2002 = vunpack.c.h.b16 %v1664
        %v2003 = vunpack.c.l.b16 %v1665
        %v2004 = vunpack.c.h.b16 %v1665
        %v2005 = vunpack.c.l.b16 %v1666
        %v2006 = vunpack.c.h.b16 %v1666
        %v2007 = vunpack.c.l.b16 %v1667
        %v2008 = vunpack.c.h.b16 %v1667
        %v2009 = vunpack.c.l.b16 %v1668
        %v2010 = vunpack.c.h.b16 %v1668
        %v2011 = vunpack.c.l.b16 %v1669
        %v2012 = vunpack.c.h.b16 %v1669
        %v2013 = vunpack.c.l.b16 %v1670
        %v2014 = vunpack.c.h.b16 %v1670
        %v2015 = vunpack.c.l.b16 %v1671
        %v2016 = vunpack.c.h.b16 %v1671
        %v2017 = vunpack.c.l.b16 %v1672
        %v2018 = vunpack.c.h.b16 %v1672
        %v2019 = vunpack.c.l.b16 %v1673
        %v2020 = vunpack.c.h.b16 %v1673
        %v2021 = vpack.c.b16 %v1959, %v1957
        %v2022 = vpack.c.b16 %v1960, %v1958
        %v2023 = vpack.c.b16 %v1963, %v1961
        %v2024 = vpack.c.b16 %v1964, %v1962
        %v2025 = vpack.c.b16 %v1967, %v1965
        %v2026 = vpack.c.b16 %v1968, %v1966
        %v2027 = vpack.c.b16 %v1971, %v1969
        %v2028 = vpack.c.b16 %v1972, %v1970
        %v2029 = vpack.c.b16 %v1975, %v1973
        %v2030 = vpack.c.b16 %v1976, %v1974
        %v2031 = vpack.c.b16 %v1979, %v1977
        %v2032 = vpack.c.b16 %v1980, %v1978
        %v2033 = vpack.c.b16 %v1983, %v1981
        %v2034 = vpack.c.b16 %v1984, %v1982
        %v2035 = vpack.c.b16 %v1987, %v1985
        %v2036 = vpack.c.b16 %v1988, %v1986
        %v2037 = vpack.c.b16 %v1991, %v1989
        %v2038 = vpack.c.b16 %v1992, %v1990
        %v2039 = vpack.c.b16 %v1995, %v1993
        %v2040 = vpack.c.b16 %v1996, %v1994
        %v2041 = vpack.c.b16 %v1999, %v1997
        %v2042 = vpack.c.b16 %v2000, %v1998
        %v2043 = vpack.c.b16 %v2003, %v2001
        %v2044 = vpack.c.b16 %v2004, %v2002
        %v2045 = vpack.c.b16 %v2007, %v2005
        %v2046 = vpack.c.b16 %v2008, %v2006
        %v2047 = vpack.c.b16 %v2011, %v2009
        %v2048 = vpack.c.b16 %v2012, %v2010
        %v2049 = vpack.c.b16 %v2015, %v2013
        %v2050 = vpack.c.b16 %v2016, %v2014
        %v2051 = vpack.c.b16 %v2019, %v2017
        %v2052 = vpack.c.b16 %v2020, %v2018
        %2085 = vmatpush.bf16.msra.mxu0 %v2035
        %2086 = vmatpush.bf16.msra.mxu0 %v2033
        %2087 = vmatpush.bf16.msra.mxu0 %v2031
        %2088 = vmatpush.bf16.msra.mxu0 %v2029
        %2089 = vmatpush.bf16.msra.mxu0 %v2027
        %2090 = vmatpush.bf16.msra.mxu0 %v2025
        %2091 = vmatpush.bf16.msra.mxu0 %v2023
        %2092 = vmatpush.bf16.msra.mxu0 %v2021
        %2093 = vmatmul.bf16.gmra.mxu0 %v1640
        %v2094 = vpop.f32.mrf.mxu0
        %v2095 = vadd.f32 %v1896, %v2094
        %v2096 = vpop.f32.mrf.mxu0
        %2097 = vdwg.mxu0
        %2098 = vmatpush.bf16.msra.mxu0 %v2051
        %2099 = vmatpush.bf16.msra.mxu0 %v2049
        %2100 = vmatpush.bf16.msra.mxu0 %v2047
        %2101 = vmatpush.bf16.msra.mxu0 %v2045
        %2102 = vmatpush.bf16.msra.mxu0 %v2043
        %2103 = vmatpush.bf16.msra.mxu0 %v2041
        %2104 = vmatpush.bf16.msra.mxu0 %v2039
        %2105 = vmatpush.bf16.msra.mxu0 %v2037
        %2106 = vmatmul.bf16.gmra.mxu0 %v1641
        %v2107 = vpop.f32.mrf.mxu0
        %v2108 = vadd.f32 %v2095, %v2107
        %v2109 = vpop.f32.mrf.mxu0
        %2110 = vdwg.mxu0
        %2111 = vmatpush.bf16.msra.mxu0 %v2036
        %2112 = vmatpush.bf16.msra.mxu0 %v2034
        %2113 = vmatpush.bf16.msra.mxu0 %v2032
        %2114 = vmatpush.bf16.msra.mxu0 %v2030
        %2115 = vmatpush.bf16.msra.mxu0 %v2028
        %2116 = vmatpush.bf16.msra.mxu0 %v2026
        %2117 = vmatpush.bf16.msra.mxu0 %v2024
        %2118 = vmatpush.bf16.msra.mxu0 %v2022
        %2119 = vmatmul.bf16.gmra.mxu0 %v1640
        %v2120 = vpop.f32.mrf.mxu0
        %v2121 = vadd.f32 %v1922, %v2120
        %v2122 = vpop.f32.mrf.mxu0
        %2123 = vdwg.mxu0
        %2124 = vmatpush.bf16.msra.mxu0 %v2052
        %2125 = vmatpush.bf16.msra.mxu0 %v2050
        %2126 = vmatpush.bf16.msra.mxu0 %v2048
        %2127 = vmatpush.bf16.msra.mxu0 %v2046
        %2128 = vmatpush.bf16.msra.mxu0 %v2044
        %2129 = vmatpush.bf16.msra.mxu0 %v2042
        %2130 = vmatpush.bf16.msra.mxu0 %v2040
        %2131 = vmatpush.bf16.msra.mxu0 %v2038
        %2132 = vmatmul.bf16.gmra.mxu0 %v1641
        %v2133 = vpop.f32.mrf.mxu0
        %v2134 = vadd.f32 %v2121, %v2133
        %v2135 = vpop.f32.mrf.mxu0
        %2136 = vdwg.mxu0
        %v2137 = vpack.c.bf16 %v1624, %v1624
        %v2138 = vpack.c.bf16 %v1638, %v1638
        %s2139 = scalar_lea.vmem [#allocation4], 512
        %v2140 = vld [vmem:[%s2139] sm:$0xff]
        %v2141 = vld [vmem:[%s2139 + $0x8] sm:$0xff]
        %v2142 = vld [vmem:[%s2139 + $0x10] sm:$0xff]
        %v2143 = vld [vmem:[%s2139 + $0x18] sm:$0xff]
        %v2144 = vld [vmem:[%s2139 + $0x20] sm:$0xff]
        %v2145 = vld [vmem:[%s2139 + $0x28] sm:$0xff]
        %v2146 = vld [vmem:[%s2139 + $0x30] sm:$0xff]
        %v2147 = vld [vmem:[%s2139 + $0x38] sm:$0xff]
        %v2148 = vld [vmem:[%s2139 + $0x40] sm:$0xff]
        %v2149 = vld [vmem:[%s2139 + $0x48] sm:$0xff]
        %v2150 = vld [vmem:[%s2139 + $0x50] sm:$0xff]
        %v2151 = vld [vmem:[%s2139 + $0x58] sm:$0xff]
        %v2152 = vld [vmem:[%s2139 + $0x60] sm:$0xff]
        %v2153 = vld [vmem:[%s2139 + $0x68] sm:$0xff]
        %v2154 = vld [vmem:[%s2139 + $0x70] sm:$0xff]
        %v2155 = vld [vmem:[%s2139 + $0x78] sm:$0xff]
        %v2156 = vld [vmem:[%s2139 + $0x80] sm:$0xff]
        %v2157 = vld [vmem:[%s2139 + $0x88] sm:$0xff]
        %v2158 = vld [vmem:[%s2139 + $0x90] sm:$0xff]
        %v2159 = vld [vmem:[%s2139 + $0x98] sm:$0xff]
        %v2160 = vld [vmem:[%s2139 + $0xa0] sm:$0xff]
        %v2161 = vld [vmem:[%s2139 + $0xa8] sm:$0xff]
        %v2162 = vld [vmem:[%s2139 + $0xb0] sm:$0xff]
        %v2163 = vld [vmem:[%s2139 + $0xb8] sm:$0xff]
        %v2164 = vld [vmem:[%s2139 + $0xc0] sm:$0xff]
        %v2165 = vld [vmem:[%s2139 + $0xc8] sm:$0xff]
        %v2166 = vld [vmem:[%s2139 + $0xd0] sm:$0xff]
        %v2167 = vld [vmem:[%s2139 + $0xd8] sm:$0xff]
        %v2168 = vld [vmem:[%s2139 + $0xe0] sm:$0xff]
        %v2169 = vld [vmem:[%s2139 + $0xe8] sm:$0xff]
        %v2170 = vld [vmem:[%s2139 + $0xf0] sm:$0xff]
        %v2171 = vld [vmem:[%s2139 + $0xf8] sm:$0xff]
        %v2204 = vunpack.c.l.b16 %v2140
        %v2205 = vunpack.c.h.b16 %v2140
        %v2206 = vunpack.c.l.b16 %v2141
        %v2207 = vunpack.c.h.b16 %v2141
        %v2208 = vunpack.c.l.b16 %v2142
        %v2209 = vunpack.c.h.b16 %v2142
        %v2210 = vunpack.c.l.b16 %v2143
        %v2211 = vunpack.c.h.b16 %v2143
        %v2212 = vunpack.c.l.b16 %v2144
        %v2213 = vunpack.c.h.b16 %v2144
        %v2214 = vunpack.c.l.b16 %v2145
        %v2215 = vunpack.c.h.b16 %v2145
        %v2216 = vunpack.c.l.b16 %v2146
        %v2217 = vunpack.c.h.b16 %v2146
        %v2218 = vunpack.c.l.b16 %v2147
        %v2219 = vunpack.c.h.b16 %v2147
        %v2220 = vunpack.c.l.b16 %v2148
        %v2221 = vunpack.c.h.b16 %v2148
        %v2222 = vunpack.c.l.b16 %v2149
        %v2223 = vunpack.c.h.b16 %v2149
        %v2224 = vunpack.c.l.b16 %v2150
        %v2225 = vunpack.c.h.b16 %v2150
        %v2226 = vunpack.c.l.b16 %v2151
        %v2227 = vunpack.c.h.b16 %v2151
        %v2228 = vunpack.c.l.b16 %v2152
        %v2229 = vunpack.c.h.b16 %v2152
        %v2230 = vunpack.c.l.b16 %v2153
        %v2231 = vunpack.c.h.b16 %v2153
        %v2232 = vunpack.c.l.b16 %v2154
        %v2233 = vunpack.c.h.b16 %v2154
        %v2234 = vunpack.c.l.b16 %v2155
        %v2235 = vunpack.c.h.b16 %v2155
        %v2236 = vunpack.c.l.b16 %v2156
        %v2237 = vunpack.c.h.b16 %v2156
        %v2238 = vunpack.c.l.b16 %v2157
        %v2239 = vunpack.c.h.b16 %v2157
        %v2240 = vunpack.c.l.b16 %v2158
        %v2241 = vunpack.c.h.b16 %v2158
        %v2242 = vunpack.c.l.b16 %v2159
        %v2243 = vunpack.c.h.b16 %v2159
        %v2244 = vunpack.c.l.b16 %v2160
        %v2245 = vunpack.c.h.b16 %v2160
        %v2246 = vunpack.c.l.b16 %v2161
        %v2247 = vunpack.c.h.b16 %v2161
        %v2248 = vunpack.c.l.b16 %v2162
        %v2249 = vunpack.c.h.b16 %v2162
        %v2250 = vunpack.c.l.b16 %v2163
        %v2251 = vunpack.c.h.b16 %v2163
        %v2252 = vunpack.c.l.b16 %v2164
        %v2253 = vunpack.c.h.b16 %v2164
        %v2254 = vunpack.c.l.b16 %v2165
        %v2255 = vunpack.c.h.b16 %v2165
        %v2256 = vunpack.c.l.b16 %v2166
        %v2257 = vunpack.c.h.b16 %v2166
        %v2258 = vunpack.c.l.b16 %v2167
        %v2259 = vunpack.c.h.b16 %v2167
        %v2260 = vunpack.c.l.b16 %v2168
        %v2261 = vunpack.c.h.b16 %v2168
        %v2262 = vunpack.c.l.b16 %v2169
        %v2263 = vunpack.c.h.b16 %v2169
        %v2264 = vunpack.c.l.b16 %v2170
        %v2265 = vunpack.c.h.b16 %v2170
        %v2266 = vunpack.c.l.b16 %v2171
        %v2267 = vunpack.c.h.b16 %v2171
        %v2268 = vpack.c.b16 %v2206, %v2204
        %v2269 = vpack.c.b16 %v2207, %v2205
        %v2270 = vpack.c.b16 %v2210, %v2208
        %v2271 = vpack.c.b16 %v2211, %v2209
        %v2272 = vpack.c.b16 %v2214, %v2212
        %v2273 = vpack.c.b16 %v2215, %v2213
        %v2274 = vpack.c.b16 %v2218, %v2216
        %v2275 = vpack.c.b16 %v2219, %v2217
        %v2276 = vpack.c.b16 %v2222, %v2220
        %v2277 = vpack.c.b16 %v2223, %v2221
        %v2278 = vpack.c.b16 %v2226, %v2224
        %v2279 = vpack.c.b16 %v2227, %v2225
        %v2280 = vpack.c.b16 %v2230, %v2228
        %v2281 = vpack.c.b16 %v2231, %v2229
        %v2282 = vpack.c.b16 %v2234, %v2232
        %v2283 = vpack.c.b16 %v2235, %v2233
        %v2284 = vpack.c.b16 %v2238, %v2236
        %v2285 = vpack.c.b16 %v2239, %v2237
        %v2286 = vpack.c.b16 %v2242, %v2240
        %v2287 = vpack.c.b16 %v2243, %v2241
        %v2288 = vpack.c.b16 %v2246, %v2244
        %v2289 = vpack.c.b16 %v2247, %v2245
        %v2290 = vpack.c.b16 %v2250, %v2248
        %v2291 = vpack.c.b16 %v2251, %v2249
        %v2292 = vpack.c.b16 %v2254, %v2252
        %v2293 = vpack.c.b16 %v2255, %v2253
        %v2294 = vpack.c.b16 %v2258, %v2256
        %v2295 = vpack.c.b16 %v2259, %v2257
        %v2296 = vpack.c.b16 %v2262, %v2260
        %v2297 = vpack.c.b16 %v2263, %v2261
        %v2298 = vpack.c.b16 %v2266, %v2264
        %v2299 = vpack.c.b16 %v2267, %v2265
        %2332 = vmatpush.bf16.msra.mxu0 %v2282
        %2333 = vmatpush.bf16.msra.mxu0 %v2280
        %2334 = vmatpush.bf16.msra.mxu0 %v2278
        %2335 = vmatpush.bf16.msra.mxu0 %v2276
        %2336 = vmatpush.bf16.msra.mxu0 %v2274
        %2337 = vmatpush.bf16.msra.mxu0 %v2272
        %2338 = vmatpush.bf16.msra.mxu0 %v2270
        %2339 = vmatpush.bf16.msra.mxu0 %v2268
        %2340 = vmatmul.bf16.gmra.mxu0 %v2137
        %v2341 = vpop.f32.mrf.mxu0
        %v2342 = vadd.f32 0.0, %v2341
        %v2343 = vpop.f32.mrf.mxu0
        %2344 = vdwg.mxu0
        %2345 = vmatpush.bf16.msra.mxu0 %v2298
        %2346 = vmatpush.bf16.msra.mxu0 %v2296
        %2347 = vmatpush.bf16.msra.mxu0 %v2294
        %2348 = vmatpush.bf16.msra.mxu0 %v2292
        %2349 = vmatpush.bf16.msra.mxu0 %v2290
        %2350 = vmatpush.bf16.msra.mxu0 %v2288
        %2351 = vmatpush.bf16.msra.mxu0 %v2286
        %2352 = vmatpush.bf16.msra.mxu0 %v2284
        %2353 = vmatmul.bf16.gmra.mxu0 %v2138
        %v2354 = vpop.f32.mrf.mxu0
        %v2355 = vadd.f32 %v2342, %v2354
        %v2356 = vpop.f32.mrf.mxu0
        %2357 = vdwg.mxu0
        %2358 = vmatpush.bf16.msra.mxu0 %v2283
        %2359 = vmatpush.bf16.msra.mxu0 %v2281
        %2360 = vmatpush.bf16.msra.mxu0 %v2279
        %2361 = vmatpush.bf16.msra.mxu0 %v2277
        %2362 = vmatpush.bf16.msra.mxu0 %v2275
        %2363 = vmatpush.bf16.msra.mxu0 %v2273
        %2364 = vmatpush.bf16.msra.mxu0 %v2271
        %2365 = vmatpush.bf16.msra.mxu0 %v2269
        %2366 = vmatmul.bf16.gmra.mxu0 %v2137
        %v2367 = vpop.f32.mrf.mxu0
        %v2368 = vadd.f32 0.0, %v2367
        %v2369 = vpop.f32.mrf.mxu0
        %2370 = vdwg.mxu0
        %2371 = vmatpush.bf16.msra.mxu0 %v2299
        %2372 = vmatpush.bf16.msra.mxu0 %v2297
        %2373 = vmatpush.bf16.msra.mxu0 %v2295
        %2374 = vmatpush.bf16.msra.mxu0 %v2293
        %2375 = vmatpush.bf16.msra.mxu0 %v2291
        %2376 = vmatpush.bf16.msra.mxu0 %v2289
        %2377 = vmatpush.bf16.msra.mxu0 %v2287
        %2378 = vmatpush.bf16.msra.mxu0 %v2285
        %2379 = vmatmul.bf16.gmra.mxu0 %v2138
        %v2380 = vpop.f32.mrf.mxu0
        %v2381 = vadd.f32 %v2368, %v2380
        %v2382 = vpop.f32.mrf.mxu0
        %2383 = vdwg.mxu0
        %v2384 = vadd.f32 %v2108, %v2355
        %v2385 = vadd.f32 %v2134, %v2381
        %v2386 = vld [vmem:[%s9] sm:$0x3]
        %v2388 = vperm.slane %v2386, 0
        %v2389 = vperm.slane %v2386, 1
        %v2392 = vadd.f32 %v2384, %v2388
        %v2393 = vadd.f32 %v2385, %v2389
        %v2394 = vmax.f32 %v2392, 0.0
        %v2395 = vmax.f32 %v2393, 0.0
        %v2396 = vpack.c.bf16 %v2394, %v2394
        %v2397 = vpack.c.bf16 %v2395, %v2395
        %v2398 = vld [vmem:[#allocation6] sm:$0xf]
        %v2399 = vld [vmem:[#allocation6 + $0x4] sm:$0xf]
        %v2400 = vld [vmem:[#allocation6 + $0x8] sm:$0xf]
        %v2401 = vld [vmem:[#allocation6 + $0xc] sm:$0xf]
        %v2402 = vld [vmem:[#allocation6 + $0x10] sm:$0xf]
        %v2403 = vld [vmem:[#allocation6 + $0x14] sm:$0xf]
        %v2404 = vld [vmem:[#allocation6 + $0x18] sm:$0xf]
        %v2405 = vld [vmem:[#allocation6 + $0x1c] sm:$0xf]
        %v2406 = vld [vmem:[#allocation6 + $0x20] sm:$0xf]
        %v2407 = vld [vmem:[#allocation6 + $0x24] sm:$0xf]
        %v2408 = vld [vmem:[#allocation6 + $0x28] sm:$0xf]
        %v2409 = vld [vmem:[#allocation6 + $0x2c] sm:$0xf]
        %v2410 = vld [vmem:[#allocation6 + $0x30] sm:$0xf]
        %v2411 = vld [vmem:[#allocation6 + $0x34] sm:$0xf]
        %v2412 = vld [vmem:[#allocation6 + $0x38] sm:$0xf]
        %v2413 = vld [vmem:[#allocation6 + $0x3c] sm:$0xf]
        %v2414 = vld [vmem:[#allocation6 + $0x40] sm:$0xf]
        %v2415 = vld [vmem:[#allocation6 + $0x44] sm:$0xf]
        %v2416 = vld [vmem:[#allocation6 + $0x48] sm:$0xf]
        %v2417 = vld [vmem:[#allocation6 + $0x4c] sm:$0xf]
        %v2418 = vld [vmem:[#allocation6 + $0x50] sm:$0xf]
        %v2419 = vld [vmem:[#allocation6 + $0x54] sm:$0xf]
        %v2420 = vld [vmem:[#allocation6 + $0x58] sm:$0xf]
        %v2421 = vld [vmem:[#allocation6 + $0x5c] sm:$0xf]
        %v2422 = vld [vmem:[#allocation6 + $0x60] sm:$0xf]
        %v2423 = vld [vmem:[#allocation6 + $0x64] sm:$0xf]
        %v2424 = vld [vmem:[#allocation6 + $0x68] sm:$0xf]
        %v2425 = vld [vmem:[#allocation6 + $0x6c] sm:$0xf]
        %v2426 = vld [vmem:[#allocation6 + $0x70] sm:$0xf]
        %v2427 = vld [vmem:[#allocation6 + $0x74] sm:$0xf]
        %v2428 = vld [vmem:[#allocation6 + $0x78] sm:$0xf]
        %v2429 = vld [vmem:[#allocation6 + $0x7c] sm:$0xf]
        %v2430 = vld [vmem:[#allocation6 + $0x80] sm:$0xf]
        %v2431 = vld [vmem:[#allocation6 + $0x84] sm:$0xf]
        %v2432 = vld [vmem:[#allocation6 + $0x88] sm:$0xf]
        %v2433 = vld [vmem:[#allocation6 + $0x8c] sm:$0xf]
        %v2434 = vld [vmem:[#allocation6 + $0x90] sm:$0xf]
        %v2435 = vld [vmem:[#allocation6 + $0x94] sm:$0xf]
        %v2436 = vld [vmem:[#allocation6 + $0x98] sm:$0xf]
        %v2437 = vld [vmem:[#allocation6 + $0x9c] sm:$0xf]
        %v2438 = vld [vmem:[#allocation6 + $0xa0] sm:$0xf]
        %v2439 = vld [vmem:[#allocation6 + $0xa4] sm:$0xf]
        %v2440 = vld [vmem:[#allocation6 + $0xa8] sm:$0xf]
        %v2441 = vld [vmem:[#allocation6 + $0xac] sm:$0xf]
        %v2442 = vld [vmem:[#allocation6 + $0xb0] sm:$0xf]
        %v2443 = vld [vmem:[#allocation6 + $0xb4] sm:$0xf]
        %v2444 = vld [vmem:[#allocation6 + $0xb8] sm:$0xf]
        %v2445 = vld [vmem:[#allocation6 + $0xbc] sm:$0xf]
        %v2446 = vld [vmem:[#allocation6 + $0xc0] sm:$0xf]
        %v2447 = vld [vmem:[#allocation6 + $0xc4] sm:$0xf]
        %v2448 = vld [vmem:[#allocation6 + $0xc8] sm:$0xf]
        %v2449 = vld [vmem:[#allocation6 + $0xcc] sm:$0xf]
        %v2450 = vld [vmem:[#allocation6 + $0xd0] sm:$0xf]
        %v2451 = vld [vmem:[#allocation6 + $0xd4] sm:$0xf]
        %v2452 = vld [vmem:[#allocation6 + $0xd8] sm:$0xf]
        %v2453 = vld [vmem:[#allocation6 + $0xdc] sm:$0xf]
        %v2454 = vld [vmem:[#allocation6 + $0xe0] sm:$0xf]
        %v2455 = vld [vmem:[#allocation6 + $0xe4] sm:$0xf]
        %v2456 = vld [vmem:[#allocation6 + $0xe8] sm:$0xf]
        %v2457 = vld [vmem:[#allocation6 + $0xec] sm:$0xf]
        %v2458 = vld [vmem:[#allocation6 + $0xf0] sm:$0xf]
        %v2459 = vld [vmem:[#allocation6 + $0xf4] sm:$0xf]
        %v2460 = vld [vmem:[#allocation6 + $0xf8] sm:$0xf]
        %v2461 = vld [vmem:[#allocation6 + $0xfc] sm:$0xf]
        %v2463 = vshrl.u32 %v2396, 16
        %v2466 = vshrl.u32 %v2397, 16
        %v2502 = vunpack.c.l.b16 %v2430
        %v2503 = vunpack.c.l.b16 %v2431
        %v2504 = vunpack.c.l.b16 %v2432
        %v2505 = vunpack.c.l.b16 %v2433
        %v2506 = vunpack.c.l.b16 %v2434
        %v2507 = vunpack.c.l.b16 %v2435
        %v2508 = vunpack.c.l.b16 %v2436
        %v2509 = vunpack.c.l.b16 %v2437
        %v2510 = vunpack.c.l.b16 %v2438
        %v2511 = vunpack.c.l.b16 %v2439
        %v2512 = vunpack.c.l.b16 %v2440
        %v2513 = vunpack.c.l.b16 %v2441
        %v2514 = vunpack.c.l.b16 %v2442
        %v2515 = vunpack.c.l.b16 %v2443
        %v2516 = vunpack.c.l.b16 %v2444
        %v2517 = vunpack.c.l.b16 %v2445
        %v2518 = vunpack.c.l.b16 %v2446
        %v2519 = vunpack.c.l.b16 %v2447
        %v2520 = vunpack.c.l.b16 %v2448
        %v2521 = vunpack.c.l.b16 %v2449
        %v2522 = vunpack.c.l.b16 %v2450
        %v2523 = vunpack.c.l.b16 %v2451
        %v2524 = vunpack.c.l.b16 %v2452
        %v2525 = vunpack.c.l.b16 %v2453
        %v2526 = vunpack.c.l.b16 %v2454
        %v2527 = vunpack.c.l.b16 %v2455
        %v2528 = vunpack.c.l.b16 %v2456
        %v2529 = vunpack.c.l.b16 %v2457
        %v2530 = vunpack.c.l.b16 %v2458
        %v2531 = vunpack.c.l.b16 %v2459
        %v2532 = vunpack.c.l.b16 %v2460
        %v2533 = vunpack.c.l.b16 %v2461
        %v2534 = vpack.c.b16 %v2503, %v2502
        %v2535 = vpack.c.b16 %v2505, %v2504
        %v2536 = vpack.c.b16 %v2507, %v2506
        %v2537 = vpack.c.b16 %v2509, %v2508
        %v2538 = vpack.c.b16 %v2511, %v2510
        %v2539 = vpack.c.b16 %v2513, %v2512
        %v2540 = vpack.c.b16 %v2515, %v2514
        %v2541 = vpack.c.b16 %v2517, %v2516
        %v2542 = vpack.c.b16 %v2519, %v2518
        %v2543 = vpack.c.b16 %v2521, %v2520
        %v2544 = vpack.c.b16 %v2523, %v2522
        %v2545 = vpack.c.b16 %v2525, %v2524
        %v2546 = vpack.c.b16 %v2527, %v2526
        %v2547 = vpack.c.b16 %v2529, %v2528
        %v2548 = vpack.c.b16 %v2531, %v2530
        %v2549 = vpack.c.b16 %v2533, %v2532
        %2566 = vmatpush.bf16.msra.mxu0 %v2541
        %2567 = vmatpush.bf16.msra.mxu0 %v2540
        %2568 = vmatpush.bf16.msra.mxu0 %v2539
        %2569 = vmatpush.bf16.msra.mxu0 %v2538
        %2570 = vmatpush.bf16.msra.mxu0 %v2537
        %2571 = vmatpush.bf16.msra.mxu0 %v2536
        %2572 = vmatpush.bf16.msra.mxu0 %v2535
        %2573 = vmatpush.bf16.msra.mxu0 %v2534
        %2574 = vmatmul.bf16.gmra.mxu0 %v2463
        %v2575 = vpop.f32.mrf.mxu0
        %v2576 = vadd.f32 0.0, %v2575
        %v2577 = vpop.f32.mrf.mxu0
        %2578 = vdwg.mxu0
        %2579 = vmatpush.bf16.msra.mxu0 %v2549
        %2580 = vmatpush.bf16.msra.mxu0 %v2548
        %2581 = vmatpush.bf16.msra.mxu0 %v2547
        %2582 = vmatpush.bf16.msra.mxu0 %v2546
        %2583 = vmatpush.bf16.msra.mxu0 %v2545
        %2584 = vmatpush.bf16.msra.mxu0 %v2544
        %2585 = vmatpush.bf16.msra.mxu0 %v2543
        %2586 = vmatpush.bf16.msra.mxu0 %v2542
        %2587 = vmatmul.bf16.gmra.mxu0 %v2466
        %v2588 = vpop.f32.mrf.mxu0
        %v2589 = vadd.f32 %v2576, %v2588
        %v2590 = vpop.f32.mrf.mxu0
        %2591 = vdwg.mxu0
        %v2624 = vunpack.c.l.b16 %v2398
        %v2625 = vunpack.c.l.b16 %v2399
        %v2626 = vunpack.c.l.b16 %v2400
        %v2627 = vunpack.c.l.b16 %v2401
        %v2628 = vunpack.c.l.b16 %v2402
        %v2629 = vunpack.c.l.b16 %v2403
        %v2630 = vunpack.c.l.b16 %v2404
        %v2631 = vunpack.c.l.b16 %v2405
        %v2632 = vunpack.c.l.b16 %v2406
        %v2633 = vunpack.c.l.b16 %v2407
        %v2634 = vunpack.c.l.b16 %v2408
        %v2635 = vunpack.c.l.b16 %v2409
        %v2636 = vunpack.c.l.b16 %v2410
        %v2637 = vunpack.c.l.b16 %v2411
        %v2638 = vunpack.c.l.b16 %v2412
        %v2639 = vunpack.c.l.b16 %v2413
        %v2640 = vunpack.c.l.b16 %v2414
        %v2641 = vunpack.c.l.b16 %v2415
        %v2642 = vunpack.c.l.b16 %v2416
        %v2643 = vunpack.c.l.b16 %v2417
        %v2644 = vunpack.c.l.b16 %v2418
        %v2645 = vunpack.c.l.b16 %v2419
        %v2646 = vunpack.c.l.b16 %v2420
        %v2647 = vunpack.c.l.b16 %v2421
        %v2648 = vunpack.c.l.b16 %v2422
        %v2649 = vunpack.c.l.b16 %v2423
        %v2650 = vunpack.c.l.b16 %v2424
        %v2651 = vunpack.c.l.b16 %v2425
        %v2652 = vunpack.c.l.b16 %v2426
        %v2653 = vunpack.c.l.b16 %v2427
        %v2654 = vunpack.c.l.b16 %v2428
        %v2655 = vunpack.c.l.b16 %v2429
        %v2656 = vpack.c.b16 %v2625, %v2624
        %v2657 = vpack.c.b16 %v2627, %v2626
        %v2658 = vpack.c.b16 %v2629, %v2628
        %v2659 = vpack.c.b16 %v2631, %v2630
        %v2660 = vpack.c.b16 %v2633, %v2632
        %v2661 = vpack.c.b16 %v2635, %v2634
        %v2662 = vpack.c.b16 %v2637, %v2636
        %v2663 = vpack.c.b16 %v2639, %v2638
        %v2664 = vpack.c.b16 %v2641, %v2640
        %v2665 = vpack.c.b16 %v2643, %v2642
        %v2666 = vpack.c.b16 %v2645, %v2644
        %v2667 = vpack.c.b16 %v2647, %v2646
        %v2668 = vpack.c.b16 %v2649, %v2648
        %v2669 = vpack.c.b16 %v2651, %v2650
        %v2670 = vpack.c.b16 %v2653, %v2652
        %v2671 = vpack.c.b16 %v2655, %v2654
        %2688 = vmatpush.bf16.msra.mxu0 %v2663
        %2689 = vmatpush.bf16.msra.mxu0 %v2662
        %2690 = vmatpush.bf16.msra.mxu0 %v2661
        %2691 = vmatpush.bf16.msra.mxu0 %v2660
        %2692 = vmatpush.bf16.msra.mxu0 %v2659
        %2693 = vmatpush.bf16.msra.mxu0 %v2658
        %2694 = vmatpush.bf16.msra.mxu0 %v2657
        %2695 = vmatpush.bf16.msra.mxu0 %v2656
        %2696 = vmatmul.bf16.gmra.mxu0 %v2396
        %v2697 = vpop.f32.mrf.mxu0
        %v2698 = vadd.f32 %v2589, %v2697
        %v2699 = vpop.f32.mrf.mxu0
        %2700 = vdwg.mxu0
        %2701 = vmatpush.bf16.msra.mxu0 %v2671
        %2702 = vmatpush.bf16.msra.mxu0 %v2670
        %2703 = vmatpush.bf16.msra.mxu0 %v2669
        %2704 = vmatpush.bf16.msra.mxu0 %v2668
        %2705 = vmatpush.bf16.msra.mxu0 %v2667
        %2706 = vmatpush.bf16.msra.mxu0 %v2666
        %2707 = vmatpush.bf16.msra.mxu0 %v2665
        %2708 = vmatpush.bf16.msra.mxu0 %v2664
        %2709 = vmatmul.bf16.gmra.mxu0 %v2397
        %v2710 = vpop.f32.mrf.mxu0
        %v2711 = vadd.f32 %v2698, %v2710
        %v2712 = vpop.f32.mrf.mxu0
        %2713 = vdwg.mxu0
        %v2714 = vld [vmem:[#allocation6 + $0x100] sm:$0xf]
        %v2715 = vld [vmem:[#allocation6 + $0x104] sm:$0xf]
        %v2716 = vld [vmem:[#allocation6 + $0x108] sm:$0xf]
        %v2717 = vld [vmem:[#allocation6 + $0x10c] sm:$0xf]
        %v2718 = vld [vmem:[#allocation6 + $0x110] sm:$0xf]
        %v2719 = vld [vmem:[#allocation6 + $0x114] sm:$0xf]
        %v2720 = vld [vmem:[#allocation6 + $0x118] sm:$0xf]
        %v2721 = vld [vmem:[#allocation6 + $0x11c] sm:$0xf]
        %v2722 = vld [vmem:[#allocation6 + $0x120] sm:$0xf]
        %v2723 = vld [vmem:[#allocation6 + $0x124] sm:$0xf]
        %v2724 = vld [vmem:[#allocation6 + $0x128] sm:$0xf]
        %v2725 = vld [vmem:[#allocation6 + $0x12c] sm:$0xf]
        %v2726 = vld [vmem:[#allocation6 + $0x130] sm:$0xf]
        %v2727 = vld [vmem:[#allocation6 + $0x134] sm:$0xf]
        %v2728 = vld [vmem:[#allocation6 + $0x138] sm:$0xf]
        %v2729 = vld [vmem:[#allocation6 + $0x13c] sm:$0xf]
        %v2730 = vld [vmem:[#allocation6 + $0x140] sm:$0xf]
        %v2731 = vld [vmem:[#allocation6 + $0x144] sm:$0xf]
        %v2732 = vld [vmem:[#allocation6 + $0x148] sm:$0xf]
        %v2733 = vld [vmem:[#allocation6 + $0x14c] sm:$0xf]
        %v2734 = vld [vmem:[#allocation6 + $0x150] sm:$0xf]
        %v2735 = vld [vmem:[#allocation6 + $0x154] sm:$0xf]
        %v2736 = vld [vmem:[#allocation6 + $0x158] sm:$0xf]
        %v2737 = vld [vmem:[#allocation6 + $0x15c] sm:$0xf]
        %v2738 = vld [vmem:[#allocation6 + $0x160] sm:$0xf]
        %v2739 = vld [vmem:[#allocation6 + $0x164] sm:$0xf]
        %v2740 = vld [vmem:[#allocation6 + $0x168] sm:$0xf]
        %v2741 = vld [vmem:[#allocation6 + $0x16c] sm:$0xf]
        %v2742 = vld [vmem:[#allocation6 + $0x170] sm:$0xf]
        %v2743 = vld [vmem:[#allocation6 + $0x174] sm:$0xf]
        %v2744 = vld [vmem:[#allocation6 + $0x178] sm:$0xf]
        %v2745 = vld [vmem:[#allocation6 + $0x17c] sm:$0xf]
        %v2748 = vrot.slane %v2396, 1
        %v2749 = vrot.slane %v2397, 1
        %v2784 = vunpack.c.l.b16 %v2714
        %v2785 = vunpack.c.l.b16 %v2715
        %v2786 = vunpack.c.l.b16 %v2716
        %v2787 = vunpack.c.l.b16 %v2717
        %v2788 = vunpack.c.l.b16 %v2718
        %v2789 = vunpack.c.l.b16 %v2719
        %v2790 = vunpack.c.l.b16 %v2720
        %v2791 = vunpack.c.l.b16 %v2721
        %v2792 = vunpack.c.l.b16 %v2722
        %v2793 = vunpack.c.l.b16 %v2723
        %v2794 = vunpack.c.l.b16 %v2724
        %v2795 = vunpack.c.l.b16 %v2725
        %v2796 = vunpack.c.l.b16 %v2726
        %v2797 = vunpack.c.l.b16 %v2727
        %v2798 = vunpack.c.l.b16 %v2728
        %v2799 = vunpack.c.l.b16 %v2729
        %v2800 = vunpack.c.l.b16 %v2730
        %v2801 = vunpack.c.l.b16 %v2731
        %v2802 = vunpack.c.l.b16 %v2732
        %v2803 = vunpack.c.l.b16 %v2733
        %v2804 = vunpack.c.l.b16 %v2734
        %v2805 = vunpack.c.l.b16 %v2735
        %v2806 = vunpack.c.l.b16 %v2736
        %v2807 = vunpack.c.l.b16 %v2737
        %v2808 = vunpack.c.l.b16 %v2738
        %v2809 = vunpack.c.l.b16 %v2739
        %v2810 = vunpack.c.l.b16 %v2740
        %v2811 = vunpack.c.l.b16 %v2741
        %v2812 = vunpack.c.l.b16 %v2742
        %v2813 = vunpack.c.l.b16 %v2743
        %v2814 = vunpack.c.l.b16 %v2744
        %v2815 = vunpack.c.l.b16 %v2745
        %v2816 = vpack.c.b16 %v2785, %v2784
        %v2817 = vpack.c.b16 %v2787, %v2786
        %v2818 = vpack.c.b16 %v2789, %v2788
        %v2819 = vpack.c.b16 %v2791, %v2790
        %v2820 = vpack.c.b16 %v2793, %v2792
        %v2821 = vpack.c.b16 %v2795, %v2794
        %v2822 = vpack.c.b16 %v2797, %v2796
        %v2823 = vpack.c.b16 %v2799, %v2798
        %v2824 = vpack.c.b16 %v2801, %v2800
        %v2825 = vpack.c.b16 %v2803, %v2802
        %v2826 = vpack.c.b16 %v2805, %v2804
        %v2827 = vpack.c.b16 %v2807, %v2806
        %v2828 = vpack.c.b16 %v2809, %v2808
        %v2829 = vpack.c.b16 %v2811, %v2810
        %v2830 = vpack.c.b16 %v2813, %v2812
        %v2831 = vpack.c.b16 %v2815, %v2814
        %2848 = vmatpush.bf16.msra.mxu0 %v2823
        %2849 = vmatpush.bf16.msra.mxu0 %v2822
        %2850 = vmatpush.bf16.msra.mxu0 %v2821
        %2851 = vmatpush.bf16.msra.mxu0 %v2820
        %2852 = vmatpush.bf16.msra.mxu0 %v2819
        %2853 = vmatpush.bf16.msra.mxu0 %v2818
        %2854 = vmatpush.bf16.msra.mxu0 %v2817
        %2855 = vmatpush.bf16.msra.mxu0 %v2816
        %2856 = vmatmul.bf16.gmra.mxu0 %v2748
        %v2857 = vpop.f32.mrf.mxu0
        %v2858 = vadd.f32 0.0, %v2857
        %v2859 = vpop.f32.mrf.mxu0
        %2860 = vdwg.mxu0
        %2861 = vmatpush.bf16.msra.mxu0 %v2831
        %2862 = vmatpush.bf16.msra.mxu0 %v2830
        %2863 = vmatpush.bf16.msra.mxu0 %v2829
        %2864 = vmatpush.bf16.msra.mxu0 %v2828
        %2865 = vmatpush.bf16.msra.mxu0 %v2827
        %2866 = vmatpush.bf16.msra.mxu0 %v2826
        %2867 = vmatpush.bf16.msra.mxu0 %v2825
        %2868 = vmatpush.bf16.msra.mxu0 %v2824
        %2869 = vmatmul.bf16.gmra.mxu0 %v2749
        %v2870 = vpop.f32.mrf.mxu0
        %v2871 = vadd.f32 %v2858, %v2870
        %v2872 = vpop.f32.mrf.mxu0
        %2873 = vdwg.mxu0
        %v2874 = vadd.f32 %v2711, %v2871
        %v2875 = vld [vmem:[#allocation6 + $0x180] sm:$0xf]
        %v2876 = vld [vmem:[#allocation6 + $0x184] sm:$0xf]
        %v2877 = vld [vmem:[#allocation6 + $0x188] sm:$0xf]
        %v2878 = vld [vmem:[#allocation6 + $0x18c] sm:$0xf]
        %v2879 = vld [vmem:[#allocation6 + $0x190] sm:$0xf]
        %v2880 = vld [vmem:[#allocation6 + $0x194] sm:$0xf]
        %v2881 = vld [vmem:[#allocation6 + $0x198] sm:$0xf]
        %v2882 = vld [vmem:[#allocation6 + $0x19c] sm:$0xf]
        %v2883 = vld [vmem:[#allocation6 + $0x1a0] sm:$0xf]
        %v2884 = vld [vmem:[#allocation6 + $0x1a4] sm:$0xf]
        %v2885 = vld [vmem:[#allocation6 + $0x1a8] sm:$0xf]
        %v2886 = vld [vmem:[#allocation6 + $0x1ac] sm:$0xf]
        %v2887 = vld [vmem:[#allocation6 + $0x1b0] sm:$0xf]
        %v2888 = vld [vmem:[#allocation6 + $0x1b4] sm:$0xf]
        %v2889 = vld [vmem:[#allocation6 + $0x1b8] sm:$0xf]
        %v2890 = vld [vmem:[#allocation6 + $0x1bc] sm:$0xf]
        %v2891 = vld [vmem:[#allocation6 + $0x1c0] sm:$0xf]
        %v2892 = vld [vmem:[#allocation6 + $0x1c4] sm:$0xf]
        %v2893 = vld [vmem:[#allocation6 + $0x1c8] sm:$0xf]
        %v2894 = vld [vmem:[#allocation6 + $0x1cc] sm:$0xf]
        %v2895 = vld [vmem:[#allocation6 + $0x1d0] sm:$0xf]
        %v2896 = vld [vmem:[#allocation6 + $0x1d4] sm:$0xf]
        %v2897 = vld [vmem:[#allocation6 + $0x1d8] sm:$0xf]
        %v2898 = vld [vmem:[#allocation6 + $0x1dc] sm:$0xf]
        %v2899 = vld [vmem:[#allocation6 + $0x1e0] sm:$0xf]
        %v2900 = vld [vmem:[#allocation6 + $0x1e4] sm:$0xf]
        %v2901 = vld [vmem:[#allocation6 + $0x1e8] sm:$0xf]
        %v2902 = vld [vmem:[#allocation6 + $0x1ec] sm:$0xf]
        %v2903 = vld [vmem:[#allocation6 + $0x1f0] sm:$0xf]
        %v2904 = vld [vmem:[#allocation6 + $0x1f4] sm:$0xf]
        %v2905 = vld [vmem:[#allocation6 + $0x1f8] sm:$0xf]
        %v2906 = vld [vmem:[#allocation6 + $0x1fc] sm:$0xf]
        %v2907 = vrot.slane %v2463, 1
        %v2908 = vrot.slane %v2466, 1
        %v2943 = vunpack.c.l.b16 %v2875
        %v2944 = vunpack.c.l.b16 %v2876
        %v2945 = vunpack.c.l.b16 %v2877
        %v2946 = vunpack.c.l.b16 %v2878
        %v2947 = vunpack.c.l.b16 %v2879
        %v2948 = vunpack.c.l.b16 %v2880
        %v2949 = vunpack.c.l.b16 %v2881
        %v2950 = vunpack.c.l.b16 %v2882
        %v2951 = vunpack.c.l.b16 %v2883
        %v2952 = vunpack.c.l.b16 %v2884
        %v2953 = vunpack.c.l.b16 %v2885
        %v2954 = vunpack.c.l.b16 %v2886
        %v2955 = vunpack.c.l.b16 %v2887
        %v2956 = vunpack.c.l.b16 %v2888
        %v2957 = vunpack.c.l.b16 %v2889
        %v2958 = vunpack.c.l.b16 %v2890
        %v2959 = vunpack.c.l.b16 %v2891
        %v2960 = vunpack.c.l.b16 %v2892
        %v2961 = vunpack.c.l.b16 %v2893
        %v2962 = vunpack.c.l.b16 %v2894
        %v2963 = vunpack.c.l.b16 %v2895
        %v2964 = vunpack.c.l.b16 %v2896
        %v2965 = vunpack.c.l.b16 %v2897
        %v2966 = vunpack.c.l.b16 %v2898
        %v2967 = vunpack.c.l.b16 %v2899
        %v2968 = vunpack.c.l.b16 %v2900
        %v2969 = vunpack.c.l.b16 %v2901
        %v2970 = vunpack.c.l.b16 %v2902
        %v2971 = vunpack.c.l.b16 %v2903
        %v2972 = vunpack.c.l.b16 %v2904
        %v2973 = vunpack.c.l.b16 %v2905
        %v2974 = vunpack.c.l.b16 %v2906
        %v2975 = vpack.c.b16 %v2944, %v2943
        %v2976 = vpack.c.b16 %v2946, %v2945
        %v2977 = vpack.c.b16 %v2948, %v2947
        %v2978 = vpack.c.b16 %v2950, %v2949
        %v2979 = vpack.c.b16 %v2952, %v2951
        %v2980 = vpack.c.b16 %v2954, %v2953
        %v2981 = vpack.c.b16 %v2956, %v2955
        %v2982 = vpack.c.b16 %v2958, %v2957
        %v2983 = vpack.c.b16 %v2960, %v2959
        %v2984 = vpack.c.b16 %v2962, %v2961
        %v2985 = vpack.c.b16 %v2964, %v2963
        %v2986 = vpack.c.b16 %v2966, %v2965
        %v2987 = vpack.c.b16 %v2968, %v2967
        %v2988 = vpack.c.b16 %v2970, %v2969
        %v2989 = vpack.c.b16 %v2972, %v2971
        %v2990 = vpack.c.b16 %v2974, %v2973
        %3007 = vmatpush.bf16.msra.mxu0 %v2982
        %3008 = vmatpush.bf16.msra.mxu0 %v2981
        %3009 = vmatpush.bf16.msra.mxu0 %v2980
        %3010 = vmatpush.bf16.msra.mxu0 %v2979
        %3011 = vmatpush.bf16.msra.mxu0 %v2978
        %3012 = vmatpush.bf16.msra.mxu0 %v2977
        %3013 = vmatpush.bf16.msra.mxu0 %v2976
        %3014 = vmatpush.bf16.msra.mxu0 %v2975
        %3015 = vmatmul.bf16.gmra.mxu0 %v2907
        %v3016 = vpop.f32.mrf.mxu0
        %v3017 = vadd.f32 0.0, %v3016
        %v3018 = vpop.f32.mrf.mxu0
        %3019 = vdwg.mxu0
        %3020 = vmatpush.bf16.msra.mxu0 %v2990
        %3021 = vmatpush.bf16.msra.mxu0 %v2989
        %3022 = vmatpush.bf16.msra.mxu0 %v2988
        %3023 = vmatpush.bf16.msra.mxu0 %v2987
        %3024 = vmatpush.bf16.msra.mxu0 %v2986
        %3025 = vmatpush.bf16.msra.mxu0 %v2985
        %3026 = vmatpush.bf16.msra.mxu0 %v2984
        %3027 = vmatpush.bf16.msra.mxu0 %v2983
        %3028 = vmatmul.bf16.gmra.mxu0 %v2908
        %v3029 = vpop.f32.mrf.mxu0
        %v3030 = vadd.f32 %v3017, %v3029
        %v3031 = vpop.f32.mrf.mxu0
        %3032 = vdwg.mxu0
        %v3033 = vadd.f32 %v2874, %v3030
        %v3034 = vld [vmem:[%s11] sm:$0x1]
        %v3035 = vadd.f32 %v3033, %v3034
        %vm3036 = vcmask 516096
        %3037 = vst.msk [vmem:[%s459] sm:$0x1] %vm3036, %v3035
        %p3038 = scmp.lt.s32.totalorder %s25, 1
        %s3039 = scalar_select %p3038, %s25, 1
        %s3040 = scalar_lea.vmem %s12, %s3039
        // Predicated region
        $region81: #{encoder_forward.1} parent=67 // pred_check
          %p3041 = pneg %p300
        $region82: #{encoder_forward.1} parent=67 // pred_check_branch
          %3043 = sbr.rel (%p3041) target = $region84
        $region83: #{encoder_forward.1} parent=67 // pred_region
          _
        $region84: #{encoder_forward.1} parent=67 // pred_fallthru
          _
      $region68: #{encoder_forward.1} parent=5 // pred_fallthru
        _
      %p3044 = scmp.le.s32.totalorder 2, %s20
      // Predicated region
      $region85: #{encoder_forward.1} parent=5 // pred_check
        %p3045 = pneg %p3044
      $region86: #{encoder_forward.1} parent=5 // pred_check_branch
        %3047 = sbr.rel (%p3045) target = $region88
      $region87: #{encoder_forward.1} parent=5 // pred_region
        %s3048 = ssub.s32 %s20, 2
        // Predicated region
        $region89: #{encoder_forward.1} parent=87 // pred_check
          %p3049 = pneg %p306
        $region90: #{encoder_forward.1} parent=87 // pred_check_branch
          %3051 = sbr.rel (%p3049) target = $region92
        $region91: #{encoder_forward.1} parent=87 // pred_region
          %p3052 = scmp.lt.s32.totalorder %s26, 1
          %s3053 = scalar_select %p3052, %s26, 1
          %s3054 = scalar_lea.vmem %s12, %s3053
        $region92: #{encoder_forward.1} parent=87 // pred_fallthru
          _
      $region88: #{encoder_forward.1} parent=5 // pred_fallthru
        _
    $region6: #{encoder_forward.1} parent=1 // loop_footer
      %s24 = sadd.s32 1, %s20
    $region7: #{encoder_forward.1} parent=1 // loop_footer_branch
      %19 = sbr.rel target = $region3
    $region8: #{encoder_forward.1} parent=1 // loop_exit
      _
    %3055 = vsyncpa [#allocation3], 1
    %s3056 = scalar_lea.sflag [#allocation3], 1
    %3057 = vsyncpa %s3056, 1
    %3058 = vsyncpa [#allocation5], 1

</llo_original>
